<compile_context>
chip_gen: v7x
topology: tpu7x:2x2x1
jax: 0.10.0
libtpu: 0.0.40
codegen_flags: <defaults>
</compile_context>

<pallas_src>
import functools
import jax
import jax.numpy as jnp
from jax.experimental import pallas as pl
from jax.experimental.pallas import tpu as pltpu

# ---- small synthetic CLIP text-transformer config ----
VOCAB   = 64
L       = 8          # context length
D       = 32         # transformer width
H       = 4          # attention heads
DH      = D // H
FF      = 4 * D
LAYERS  = 2
EPS     = 1e-5
NEG_INF = -1e30      # f32 mask fill (softmax math stays f32)

# packed per-layer vector-parameter slab: (LAYERS, NVEC, VW), lane-dense
VW = max(FF, 3 * D)                                   # 128 lanes
(R_LN1G, R_LN1B, R_BQKV, R_BO, R_LN2G, R_LN2B, R_B1, R_B2) = range(8)
NVEC = 8


def _layernorm(x, g, b):
    mu  = jnp.mean(x, axis=-1, keepdims=True)
    var = jnp.mean((x - mu) ** 2, axis=-1, keepdims=True)
    return (x - mu) * jax.lax.rsqrt(var + EPS) * g + b


# ---------------- fused Pallas kernel ----------------

def clip_text_fused_kernel(eot_ref,            # SMEM (B,) i32: b*L + argmax(text[b])
                           x_ref,              # (B*L, D)  embedded tokens (+pos)
                           wqkv_ref,           # (LAYERS, D, 3D)
                           wo_ref,             # (LAYERS, D, D)   unsplit out-proj
                           w1_ref,             # (LAYERS, D, FF)
                           w2_ref,             # (LAYERS, FF, D)
                           vec_ref,            # (LAYERS, NVEC, VW) LN/bias slab
                           lnf_ref,            # (2, D)   ln_final gain / bias
                           proj_ref,           # (D, D)   text projection
                           tokens_ref,         # out: (B*L, D) ln_final(tokens)
                           cls_ref):           # out: (B, D)   EOT @ text_projection
    N = x_ref.shape[0]
    B = N // L
    G = H * B
    scale = 1.0 / (DH ** 0.5)

    # causal mask (CLIP's triu(-inf, diagonal=1)) — built once per forward
    rows = jax.lax.broadcasted_iota(jnp.int32, (1, L, L), 1)
    cols = jax.lax.broadcasted_iota(jnp.int32, (1, L, L), 2)
    causal = rows >= cols                                      # (1, L, L)

    def layer_body(l, x):
        vec = vec_ref[l]                                       # (NVEC, VW) one load
        ln1_g = vec[R_LN1G, :D]
        ln1_b = vec[R_LN1B, :D]
        bqkv  = vec[R_BQKV, :3 * D]
        bo    = vec[R_BO,   :D]
        ln2_g = vec[R_LN2G, :D]
        ln2_b = vec[R_LN2B, :D]
        b1    = vec[R_B1,   :FF]
        b2    = vec[R_B2,   :D]

        # ---- causal MHA: ONE fused (N,D)@(D,3D) QKV matmul ----
        xn  = _layernorm(x, ln1_g, ln1_b)                      # (N, D)
        qkv = jnp.dot(xn, wqkv_ref[l],
                      preferred_element_type=jnp.float32) + bqkv    # (N, 3D)

        def to_heads(col0):    # lane slices -> (H, N, DH) -> (G, L, DH); g = h*B + b
            hs = [qkv[:, col0 + h * DH: col0 + (h + 1) * DH] for h in range(H)]
            return jnp.stack(hs, axis=0).reshape(G, L, DH)

        qg = to_heads(0)
        kg = to_heads(D)
        vg = to_heads(2 * D)

        s = jnp.einsum('gqe,gke->gqk', qg, kg,
                       preferred_element_type=jnp.float32) * scale   # (G, L, L)
        s = jnp.where(causal, s, NEG_INF)
        p = jnp.exp(s - jnp.max(s, axis=-1, keepdims=True))
        p = p * pl.reciprocal(jnp.sum(p, axis=-1, keepdims=True), approx=True)
        og = jnp.einsum('gqk,gke->gqe', p, vg,
                        preferred_element_type=jnp.float32)          # (G, L, DH)

        # heads back onto the lane axis, then ONE full-K (N,D)@(D,D) out-proj
        oh = og.reshape(H, N, DH)
        o  = jnp.concatenate([oh[h] for h in range(H)], axis=-1)     # (N, D)
        x = x + jnp.dot(o, wo_ref[l], preferred_element_type=jnp.float32) + bo

        # ---- MLP with QuickGELU (x * sigmoid(1.702 x)) ----
        xn  = _layernorm(x, ln2_g, ln2_b)
        hdn = jnp.dot(xn, w1_ref[l], preferred_element_type=jnp.float32) + b1
        hdn = hdn * jax.nn.sigmoid(1.702 * hdn)
        x = x + jnp.dot(hdn, w2_ref[l], preferred_element_type=jnp.float32) + b2
        return x

    x = jax.lax.fori_loop(0, LAYERS, layer_body, x_ref[...])

    # ---- ln_final, scalar-prefetched EOT gather, text projection ----
    x_ln = _layernorm(x, lnf_ref[0], lnf_ref[1])               # (N, D)
    tokens_ref[...] = x_ln
    eot = jnp.concatenate(
        [tokens_ref[pl.ds(eot_ref[b], 1), :] for b in range(B)], axis=0)   # (B, D)
    cls_ref[...] = jnp.dot(eot, proj_ref[...], preferred_element_type=jnp.float32)


# ---------------- wrapper plumbing ----------------

def _vmem():
    return pl.BlockSpec(memory_space=pltpu.MemorySpace.VMEM)


def _pack_params(params):
    """Stack per-layer weights over LAYERS; pack all 1-D params into one slab."""
    blocks = params["blocks"]
    stack = lambda name: jnp.stack([blk[name] for blk in blocks])
    wqkv = stack("wqkv")                                   # (LAYERS, D, 3D) unsplit
    wo   = stack("wo")                                     # (LAYERS, D, D)  unsplit
    w1   = stack("w1")                                     # (LAYERS, D, FF)
    w2   = stack("w2")                                     # (LAYERS, FF, D)

    def pad(v):                                            # (LAYERS, n) -> (LAYERS, VW)
        return jnp.pad(v, ((0, 0), (0, VW - v.shape[-1])))

    rows = [None] * NVEC
    rows[R_LN1G] = pad(stack("ln1_g"))
    rows[R_LN1B] = pad(stack("ln1_b"))
    rows[R_BQKV] = pad(stack("bqkv"))
    rows[R_BO]   = pad(stack("bo"))
    rows[R_LN2G] = pad(stack("ln2_g"))
    rows[R_LN2B] = pad(stack("ln2_b"))
    rows[R_B1]   = pad(stack("b1"))
    rows[R_B2]   = pad(stack("b2"))
    vecs = jnp.stack(rows, axis=1)                         # (LAYERS, NVEC, VW)

    lnf = jnp.stack([params["lnf_g"], params["lnf_b"]])    # (2, D)
    return wqkv, wo, w1, w2, vecs, lnf


def clip_text_fused(eot_idx, x0, wqkv, wo, w1, w2, vecs, lnf, proj):
    N = x0.shape[0]
    B = eot_idx.shape[0]
    return pl.pallas_call(
        clip_text_fused_kernel,
        out_shape=(jax.ShapeDtypeStruct((N, D), jnp.float32),   # ln_final(tokens), flat
                   jax.ShapeDtypeStruct((B, D), jnp.float32)),  # cls token
        grid_spec=pltpu.PrefetchScalarGridSpec(
            num_scalar_prefetch=1,                              # EOT row ids -> SMEM
            grid=(1,),
            in_specs=[_vmem() for _ in range(8)],
            out_specs=(_vmem(), _vmem()),
        ),
        compiler_params=pltpu.CompilerParams(dimension_semantics=("arbitrary",)),
    )(eot_idx, x0, wqkv, wo, w1, w2, vecs, lnf, proj)


# ---------------- parameter init (deterministic, synthetic) ----------------

def init_params(key):
    keys = iter(jax.random.split(key, 128))

    def nrm(shape, std=0.02):
        return jax.random.normal(next(keys), shape, dtype=jnp.float32) * std

    blocks = []
    for _ in range(LAYERS):
        blocks.append(dict(
            ln1_g=jnp.ones((D,), jnp.float32),  ln1_b=jnp.zeros((D,), jnp.float32),
            # NOTE: real CLIP stores in_proj as (3D, D) used as x @ W.T; synthetic
            # weights here are already (D, 3D) in x @ W convention.
            wqkv=nrm((D, 3 * D)),               bqkv=jnp.zeros((3 * D,), jnp.float32),
            wo=nrm((D, D)),                     bo=jnp.zeros((D,), jnp.float32),
            ln2_g=jnp.ones((D,), jnp.float32),  ln2_b=jnp.zeros((D,), jnp.float32),
            w1=nrm((D, FF)),                    b1=jnp.zeros((FF,), jnp.float32),
            w2=nrm((FF, D)),                    b2=jnp.zeros((D,), jnp.float32),
        ))
    return dict(
        tok_emb=nrm((VOCAB, D)),
        pos_emb=nrm((L, D), std=0.01),
        blocks=blocks,
        lnf_g=jnp.ones((D,), jnp.float32),
        lnf_b=jnp.zeros((D,), jnp.float32),
        text_projection=nrm((D, D)),   # embed_dim == width so return_tokens concat is valid
    )


# ---------------- Clip_Text.forward ----------------

@functools.partial(jax.jit, static_argnames=("return_tokens",))
def clip_text_forward(text, params, return_tokens=True):
    B = text.shape[0]
    # glue: data-dependent embedding gather + positional add (HBM gather, outside kernel)
    x0 = (params["tok_emb"][text] + params["pos_emb"]).reshape(B * L, D)
    # glue: EOT (argmax over token ids) -> flat row ids for in-kernel SMEM gather
    eot_idx = (jnp.arange(B) * L + jnp.argmax(text, axis=-1)).astype(jnp.int32)

    wqkv, wo, w1, w2, vecs, lnf = _pack_params(params)
    tokens_flat, cls_token = clip_text_fused(
        eot_idx, x0, wqkv, wo, w1, w2, vecs, lnf, params["text_projection"])

    if return_tokens:
        x_ln = tokens_flat.reshape(B, L, D)
        return jnp.concatenate([cls_token[:, None, :], x_ln], axis=1)   # (B, L+1, D)
    return cls_token


if __name__ == "__main__":
    key = jax.random.PRNGKey(0)
    pkey, tkey = jax.random.split(key)
    params = init_params(pkey)

    B = 2
    text = jax.random.randint(tkey, (B, L), 1, VOCAB, dtype=jnp.int32)

    out_tokens = clip_text_forward(text, params, return_tokens=True)
    out_cls = clip_text_forward(text, params, return_tokens=False)
    jax.block_until_ready(out_tokens)
    jax.block_until_ready(out_cls)

    assert out_tokens.shape == (B, L + 1, D)
    assert out_cls.shape == (B, D)
    assert bool(jnp.all(jnp.isfinite(out_tokens))) and bool(jnp.all(jnp.isfinite(out_cls)))
    print("KERNEL_OK")
</pallas_src>

<mosaic_0001>
module attributes {stable_mosaic.version = 11 : i64} {
  func.func @clip_text_fused_kernel(%arg0: i32, %arg1: memref<2xi32, #tpu.memory_space<smem>>, %arg2: memref<16x32xf32, #tpu.memory_space<vmem>>, %arg3: memref<2x32x96xf32, #tpu.memory_space<vmem>>, %arg4: memref<2x32x32xf32, #tpu.memory_space<vmem>>, %arg5: memref<2x32x128xf32, #tpu.memory_space<vmem>>, %arg6: memref<2x128x32xf32, #tpu.memory_space<vmem>>, %arg7: memref<2x8x128xf32, #tpu.memory_space<vmem>>, %arg8: memref<2x32xf32, #tpu.memory_space<vmem>>, %arg9: memref<32x32xf32, #tpu.memory_space<vmem>>, %arg10: memref<16x32xf32, #tpu.memory_space<vmem>>, %arg11: memref<2x32xf32, #tpu.memory_space<vmem>>) attributes {dimension_semantics = [#tpu.dimension_semantics<arbitrary>], iteration_bounds = array<i64: 1>, scalar_prefetch = 1 : i64, scratch_operands = 0 : i64, tpu.core_type = #tpu.core_type<tc>, window_params = [{pipeline_mode = #tpu.pipeline_mode<synchronous>, transform_indices = @transform_0, window_bounds = array<i64: 16, 32>}, {pipeline_mode = #tpu.pipeline_mode<synchronous>, transform_indices = @transform_1, window_bounds = array<i64: 2, 32, 96>}, {pipeline_mode = #tpu.pipeline_mode<synchronous>, transform_indices = @transform_2, window_bounds = array<i64: 2, 32, 32>}, {pipeline_mode = #tpu.pipeline_mode<synchronous>, transform_indices = @transform_3, window_bounds = array<i64: 2, 32, 128>}, {pipeline_mode = #tpu.pipeline_mode<synchronous>, transform_indices = @transform_4, window_bounds = array<i64: 2, 128, 32>}, {pipeline_mode = #tpu.pipeline_mode<synchronous>, transform_indices = @transform_5, window_bounds = array<i64: 2, 8, 128>}, {pipeline_mode = #tpu.pipeline_mode<synchronous>, transform_indices = @transform_6, window_bounds = array<i64: 2, 32>}, {pipeline_mode = #tpu.pipeline_mode<synchronous>, transform_indices = @transform_7, window_bounds = array<i64: 32, 32>}, {pipeline_mode = #tpu.pipeline_mode<synchronous>, transform_indices = @transform_8, window_bounds = array<i64: 16, 32>}, {pipeline_mode = #tpu.pipeline_mode<synchronous>, transform_indices = @transform_9, window_bounds = array<i64: 2, 32>}]} {
    %0 = tpu.iota {dimensions = array<i32: 1>} : vector<1x8x8xi32>
    %1 = tpu.iota {dimensions = array<i32: 2>} : vector<1x8x8xi32>
    %2 = arith.cmpi sge, %0, %1 : vector<1x8x8xi32>
    %c0 = arith.constant 0 : index
    %c0_0 = arith.constant 0 : index
    %3 = vector.load %arg2[%c0, %c0_0] : memref<16x32xf32, #tpu.memory_space<vmem>>, vector<16x32xf32>
    %c0_i32 = arith.constant 0 : i32
    %c2_i32 = arith.constant 2 : i32
    %4 = arith.addi %c0_i32, %c2_i32 : i32
    %c1_i32 = arith.constant 1 : i32
    %5 = scf.for %arg12 = %c0_i32 to %4 step %c1_i32 iter_args(%arg13 = %3) -> (vector<16x32xf32>)  : i32 {
      %45 = arith.index_cast %arg12 : i32 to index
      %c0_20 = arith.constant 0 : index
      %c0_21 = arith.constant 0 : index
      %46 = vector.load %arg7[%45, %c0_20, %c0_21] : memref<2x8x128xf32, #tpu.memory_space<vmem>>, vector<1x8x128xf32>
      %47 = vector.shape_cast %46 : vector<1x8x128xf32> to vector<8x128xf32>
      %48 = vector.extract_strided_slice %47 {offsets = [0, 0], sizes = [1, 32], strides = [1, 1]} : vector<8x128xf32> to vector<1x32xf32>
      %49 = vector.shape_cast %48 : vector<1x32xf32> to vector<32xf32>
      %50 = vector.extract_strided_slice %47 {offsets = [1, 0], sizes = [1, 32], strides = [1, 1]} : vector<8x128xf32> to vector<1x32xf32>
      %51 = vector.shape_cast %50 : vector<1x32xf32> to vector<32xf32>
      %52 = vector.extract_strided_slice %47 {offsets = [2, 0], sizes = [1, 96], strides = [1, 1]} : vector<8x128xf32> to vector<1x96xf32>
      %53 = vector.shape_cast %52 : vector<1x96xf32> to vector<96xf32>
      %54 = vector.extract_strided_slice %47 {offsets = [3, 0], sizes = [1, 32], strides = [1, 1]} : vector<8x128xf32> to vector<1x32xf32>
      %55 = vector.shape_cast %54 : vector<1x32xf32> to vector<32xf32>
      %56 = vector.extract_strided_slice %47 {offsets = [4, 0], sizes = [1, 32], strides = [1, 1]} : vector<8x128xf32> to vector<1x32xf32>
      %57 = vector.shape_cast %56 : vector<1x32xf32> to vector<32xf32>
      %58 = vector.extract_strided_slice %47 {offsets = [5, 0], sizes = [1, 32], strides = [1, 1]} : vector<8x128xf32> to vector<1x32xf32>
      %59 = vector.shape_cast %58 : vector<1x32xf32> to vector<32xf32>
      %60 = vector.extract_strided_slice %47 {offsets = [6, 0], sizes = [1, 128], strides = [1, 1]} : vector<8x128xf32> to vector<1x128xf32>
      %61 = vector.shape_cast %60 : vector<1x128xf32> to vector<128xf32>
      %62 = vector.extract_strided_slice %47 {offsets = [7, 0], sizes = [1, 32], strides = [1, 1]} : vector<8x128xf32> to vector<1x32xf32>
      %63 = vector.shape_cast %62 : vector<1x32xf32> to vector<32xf32>
      %cst_22 = arith.constant dense<0.000000e+00> : vector<16xf32>
      %64 = vector.multi_reduction <add>, %arg13, %cst_22 [1] : vector<16x32xf32> to vector<16xf32>
      %65 = vector.shape_cast %64 : vector<16xf32> to vector<16x1xf32>
      %cst_23 = arith.constant 3.200000e+01 : f32
      %66 = vector.broadcast %cst_23 : f32 to vector<16x1xf32>
      %67 = arith.divf %65, %66 : vector<16x1xf32>
      %68 = vector.broadcast %67 : vector<16x1xf32> to vector<16x32xf32>
      %69 = arith.subf %arg13, %68 : vector<16x32xf32>
      %70 = arith.mulf %69, %69 : vector<16x32xf32>
      %cst_24 = arith.constant dense<0.000000e+00> : vector<16xf32>
      %71 = vector.multi_reduction <add>, %70, %cst_24 [1] : vector<16x32xf32> to vector<16xf32>
      %72 = vector.shape_cast %71 : vector<16xf32> to vector<16x1xf32>
      %cst_25 = arith.constant 3.200000e+01 : f32
      %73 = vector.broadcast %cst_25 : f32 to vector<16x1xf32>
      %74 = arith.divf %72, %73 : vector<16x1xf32>
      %75 = vector.broadcast %67 : vector<16x1xf32> to vector<16x32xf32>
      %76 = arith.subf %arg13, %75 : vector<16x32xf32>
      %cst_26 = arith.constant 9.99999974E-6 : f32
      %77 = vector.broadcast %cst_26 : f32 to vector<16x1xf32>
      %78 = arith.addf %74, %77 : vector<16x1xf32>
      %79 = math.rsqrt %78 : vector<16x1xf32>
      %80 = vector.broadcast %79 : vector<16x1xf32> to vector<16x32xf32>
      %81 = arith.mulf %76, %80 : vector<16x32xf32>
      %82 = vector.shape_cast %49 : vector<32xf32> to vector<1x32xf32>
      %83 = vector.broadcast %82 : vector<1x32xf32> to vector<16x32xf32>
      %84 = arith.mulf %81, %83 : vector<16x32xf32>
      %85 = vector.shape_cast %51 : vector<32xf32> to vector<1x32xf32>
      %86 = vector.broadcast %85 : vector<1x32xf32> to vector<16x32xf32>
      %87 = arith.addf %84, %86 : vector<16x32xf32>
      %88 = arith.index_cast %arg12 : i32 to index
      %c0_27 = arith.constant 0 : index
      %c0_28 = arith.constant 0 : index
      %89 = vector.load %arg3[%88, %c0_27, %c0_28] : memref<2x32x96xf32, #tpu.memory_space<vmem>>, vector<1x32x96xf32>
      %90 = vector.shape_cast %89 : vector<1x32x96xf32> to vector<32x96xf32>
      %cst_29 = arith.constant dense<0.000000e+00> : vector<16x96xf32>
      %91 = tpu.matmul %87, %90, %cst_29 {dimension_numbers = #tpu.dot_dimension_numbers<[1], [0], [0], [1], [0, 0, 1, 1], [], []>} : vector<16x32xf32>, vector<32x96xf32>, vector<16x96xf32> -> vector<16x96xf32>
      %92 = vector.shape_cast %53 : vector<96xf32> to vector<1x96xf32>
      %93 = vector.broadcast %92 : vector<1x96xf32> to vector<16x96xf32>
      %94 = arith.addf %91, %93 : vector<16x96xf32>
      %95 = vector.extract_strided_slice %94 {offsets = [0, 0], sizes = [16, 8], strides = [1, 1]} : vector<16x96xf32> to vector<16x8xf32>
      %96 = vector.extract_strided_slice %94 {offsets = [0, 8], sizes = [16, 8], strides = [1, 1]} : vector<16x96xf32> to vector<16x8xf32>
      %97 = vector.extract_strided_slice %94 {offsets = [0, 16], sizes = [16, 8], strides = [1, 1]} : vector<16x96xf32> to vector<16x8xf32>
      %98 = vector.extract_strided_slice %94 {offsets = [0, 24], sizes = [16, 8], strides = [1, 1]} : vector<16x96xf32> to vector<16x8xf32>
      %99 = vector.shape_cast %95 : vector<16x8xf32> to vector<1x16x8xf32>
      %100 = vector.shape_cast %96 : vector<16x8xf32> to vector<1x16x8xf32>
      %101 = vector.shape_cast %97 : vector<16x8xf32> to vector<1x16x8xf32>
      %102 = vector.shape_cast %98 : vector<16x8xf32> to vector<1x16x8xf32>
      %103 = tpu.concatenate %99, %100, %101, %102 in 0 : vector<1x16x8xf32>, vector<1x16x8xf32>, vector<1x16x8xf32>, vector<1x16x8xf32> -> vector<4x16x8xf32>
      %104 = vector.shape_cast %103 : vector<4x16x8xf32> to vector<8x8x8xf32>
      %105 = vector.extract_strided_slice %94 {offsets = [0, 32], sizes = [16, 8], strides = [1, 1]} : vector<16x96xf32> to vector<16x8xf32>
      %106 = vector.extract_strided_slice %94 {offsets = [0, 40], sizes = [16, 8], strides = [1, 1]} : vector<16x96xf32> to vector<16x8xf32>
      %107 = vector.extract_strided_slice %94 {offsets = [0, 48], sizes = [16, 8], strides = [1, 1]} : vector<16x96xf32> to vector<16x8xf32>
      %108 = vector.extract_strided_slice %94 {offsets = [0, 56], sizes = [16, 8], strides = [1, 1]} : vector<16x96xf32> to vector<16x8xf32>
      %109 = vector.shape_cast %105 : vector<16x8xf32> to vector<1x16x8xf32>
      %110 = vector.shape_cast %106 : vector<16x8xf32> to vector<1x16x8xf32>
      %111 = vector.shape_cast %107 : vector<16x8xf32> to vector<1x16x8xf32>
      %112 = vector.shape_cast %108 : vector<16x8xf32> to vector<1x16x8xf32>
      %113 = tpu.concatenate %109, %110, %111, %112 in 0 : vector<1x16x8xf32>, vector<1x16x8xf32>, vector<1x16x8xf32>, vector<1x16x8xf32> -> vector<4x16x8xf32>
      %114 = vector.shape_cast %113 : vector<4x16x8xf32> to vector<8x8x8xf32>
      %115 = vector.extract_strided_slice %94 {offsets = [0, 64], sizes = [16, 8], strides = [1, 1]} : vector<16x96xf32> to vector<16x8xf32>
      %116 = vector.extract_strided_slice %94 {offsets = [0, 72], sizes = [16, 8], strides = [1, 1]} : vector<16x96xf32> to vector<16x8xf32>
      %117 = vector.extract_strided_slice %94 {offsets = [0, 80], sizes = [16, 8], strides = [1, 1]} : vector<16x96xf32> to vector<16x8xf32>
      %118 = vector.extract_strided_slice %94 {offsets = [0, 88], sizes = [16, 8], strides = [1, 1]} : vector<16x96xf32> to vector<16x8xf32>
      %119 = vector.shape_cast %115 : vector<16x8xf32> to vector<1x16x8xf32>
      %120 = vector.shape_cast %116 : vector<16x8xf32> to vector<1x16x8xf32>
      %121 = vector.shape_cast %117 : vector<16x8xf32> to vector<1x16x8xf32>
      %122 = vector.shape_cast %118 : vector<16x8xf32> to vector<1x16x8xf32>
      %123 = tpu.concatenate %119, %120, %121, %122 in 0 : vector<1x16x8xf32>, vector<1x16x8xf32>, vector<1x16x8xf32>, vector<1x16x8xf32> -> vector<4x16x8xf32>
      %124 = vector.shape_cast %123 : vector<4x16x8xf32> to vector<8x8x8xf32>
      "tpu.trace_start"() <{level = 10 : i32, message = "gqe,gke->gqk"}> : () -> ()
      %cst_30 = arith.constant dense<0.000000e+00> : vector<8x8x8xf32>
      %125 = tpu.matmul %104, %114, %cst_30 {dimension_numbers = #tpu.dot_dimension_numbers<[2], [2], [1], [1], [0, 0, 0, 1, 1, 1], [0], [0]>} : vector<8x8x8xf32>, vector<8x8x8xf32>, vector<8x8x8xf32> -> vector<8x8x8xf32>
      "tpu.trace_stop"() : () -> ()
      %cst_31 = arith.constant 0.353553385 : f32
      %126 = vector.broadcast %cst_31 : f32 to vector<8x8x8xf32>
      %127 = arith.mulf %125, %126 : vector<8x8x8xf32>
      %cst_32 = arith.constant -1.000000e+30 : f32
      %128 = vector.shape_cast %2 : vector<1x8x8xi1> to vector<1x8x8xi1>
      %129 = vector.broadcast %128 : vector<1x8x8xi1> to vector<8x8x8xi1>
      %130 = vector.broadcast %cst_32 : f32 to vector<8x8x8xf32>
      %131 = arith.select %129, %127, %130 : vector<8x8x8xi1>, vector<8x8x8xf32>
      %cst_33 = arith.constant dense<0xFF800000> : vector<8x8xf32>
      %132 = vector.multi_reduction <maximumf>, %131, %cst_33 [2] : vector<8x8x8xf32> to vector<8x8xf32>
      %133 = vector.shape_cast %132 : vector<8x8xf32> to vector<8x8x1xf32>
      %134 = vector.broadcast %133 : vector<8x8x1xf32> to vector<8x8x8xf32>
      %135 = arith.subf %131, %134 : vector<8x8x8xf32>
      %136 = math.exp %135 : vector<8x8x8xf32>
      %cst_34 = arith.constant dense<0.000000e+00> : vector<8x8xf32>
      %137 = vector.multi_reduction <add>, %136, %cst_34 [2] : vector<8x8x8xf32> to vector<8x8xf32>
      %138 = vector.shape_cast %137 : vector<8x8xf32> to vector<8x8x1xf32>
      %139 = tpu.reciprocal %138 {approx = true} : vector<8x8x1xf32> -> vector<8x8x1xf32>
      %140 = vector.broadcast %139 : vector<8x8x1xf32> to vector<8x8x8xf32>
      %141 = arith.mulf %136, %140 : vector<8x8x8xf32>
      "tpu.trace_start"() <{level = 10 : i32, message = "gqk,gke->gqe"}> : () -> ()
      %cst_35 = arith.constant dense<0.000000e+00> : vector<8x8x8xf32>
      %142 = tpu.matmul %141, %124, %cst_35 {dimension_numbers = #tpu.dot_dimension_numbers<[2], [1], [1], [2], [0, 0, 0, 1, 1, 2], [0], [0]>} : vector<8x8x8xf32>, vector<8x8x8xf32>, vector<8x8x8xf32> -> vector<8x8x8xf32>
      "tpu.trace_stop"() : () -> ()
      %143 = vector.shape_cast %142 : vector<8x8x8xf32> to vector<4x16x8xf32>
      %144 = vector.extract_strided_slice %143 {offsets = [0, 0, 0], sizes = [1, 16, 8], strides = [1, 1, 1]} : vector<4x16x8xf32> to vector<1x16x8xf32>
      %145 = vector.shape_cast %144 : vector<1x16x8xf32> to vector<16x8xf32>
      %146 = vector.extract_strided_slice %143 {offsets = [1, 0, 0], sizes = [1, 16, 8], strides = [1, 1, 1]} : vector<4x16x8xf32> to vector<1x16x8xf32>
      %147 = vector.shape_cast %146 : vector<1x16x8xf32> to vector<16x8xf32>
      %148 = vector.extract_strided_slice %143 {offsets = [2, 0, 0], sizes = [1, 16, 8], strides = [1, 1, 1]} : vector<4x16x8xf32> to vector<1x16x8xf32>
      %149 = vector.shape_cast %148 : vector<1x16x8xf32> to vector<16x8xf32>
      %150 = vector.extract_strided_slice %143 {offsets = [3, 0, 0], sizes = [1, 16, 8], strides = [1, 1, 1]} : vector<4x16x8xf32> to vector<1x16x8xf32>
      %151 = vector.shape_cast %150 : vector<1x16x8xf32> to vector<16x8xf32>
      %152 = tpu.concatenate %145, %147, %149, %151 in 1 : vector<16x8xf32>, vector<16x8xf32>, vector<16x8xf32>, vector<16x8xf32> -> vector<16x32xf32>
      %153 = arith.index_cast %arg12 : i32 to index
      %c0_36 = arith.constant 0 : index
      %c0_37 = arith.constant 0 : index
      %154 = vector.load %arg4[%153, %c0_36, %c0_37] : memref<2x32x32xf32, #tpu.memory_space<vmem>>, vector<1x32x32xf32>
      %155 = vector.shape_cast %154 : vector<1x32x32xf32> to vector<32x32xf32>
      %cst_38 = arith.constant dense<0.000000e+00> : vector<16x32xf32>
      %156 = tpu.matmul %152, %155, %cst_38 {dimension_numbers = #tpu.dot_dimension_numbers<[1], [0], [0], [1], [0, 0, 1, 1], [], []>} : vector<16x32xf32>, vector<32x32xf32>, vector<16x32xf32> -> vector<16x32xf32>
      %157 = arith.addf %arg13, %156 : vector<16x32xf32>
      %158 = vector.shape_cast %55 : vector<32xf32> to vector<1x32xf32>
      %159 = vector.broadcast %158 : vector<1x32xf32> to vector<16x32xf32>
      %160 = arith.addf %157, %159 : vector<16x32xf32>
      %cst_39 = arith.constant dense<0.000000e+00> : vector<16xf32>
      %161 = vector.multi_reduction <add>, %160, %cst_39 [1] : vector<16x32xf32> to vector<16xf32>
      %162 = vector.shape_cast %161 : vector<16xf32> to vector<16x1xf32>
      %cst_40 = arith.constant 3.200000e+01 : f32
      %163 = vector.broadcast %cst_40 : f32 to vector<16x1xf32>
      %164 = arith.divf %162, %163 : vector<16x1xf32>
      %165 = vector.broadcast %164 : vector<16x1xf32> to vector<16x32xf32>
      %166 = arith.subf %160, %165 : vector<16x32xf32>
      %167 = arith.mulf %166, %166 : vector<16x32xf32>
      %cst_41 = arith.constant dense<0.000000e+00> : vector<16xf32>
      %168 = vector.multi_reduction <add>, %167, %cst_41 [1] : vector<16x32xf32> to vector<16xf32>
      %169 = vector.shape_cast %168 : vector<16xf32> to vector<16x1xf32>
      %cst_42 = arith.constant 3.200000e+01 : f32
      %170 = vector.broadcast %cst_42 : f32 to vector<16x1xf32>
      %171 = arith.divf %169, %170 : vector<16x1xf32>
      %172 = vector.broadcast %164 : vector<16x1xf32> to vector<16x32xf32>
      %173 = arith.subf %160, %172 : vector<16x32xf32>
      %cst_43 = arith.constant 9.99999974E-6 : f32
      %174 = vector.broadcast %cst_43 : f32 to vector<16x1xf32>
      %175 = arith.addf %171, %174 : vector<16x1xf32>
      %176 = math.rsqrt %175 : vector<16x1xf32>
      %177 = vector.broadcast %176 : vector<16x1xf32> to vector<16x32xf32>
      %178 = arith.mulf %173, %177 : vector<16x32xf32>
      %179 = vector.shape_cast %57 : vector<32xf32> to vector<1x32xf32>
      %180 = vector.broadcast %179 : vector<1x32xf32> to vector<16x32xf32>
      %181 = arith.mulf %178, %180 : vector<16x32xf32>
      %182 = vector.shape_cast %59 : vector<32xf32> to vector<1x32xf32>
      %183 = vector.broadcast %182 : vector<1x32xf32> to vector<16x32xf32>
      %184 = arith.addf %181, %183 : vector<16x32xf32>
      %185 = arith.index_cast %arg12 : i32 to index
      %c0_44 = arith.constant 0 : index
      %c0_45 = arith.constant 0 : index
      %186 = vector.load %arg5[%185, %c0_44, %c0_45] : memref<2x32x128xf32, #tpu.memory_space<vmem>>, vector<1x32x128xf32>
      %187 = vector.shape_cast %186 : vector<1x32x128xf32> to vector<32x128xf32>
      %cst_46 = arith.constant dense<0.000000e+00> : vector<16x128xf32>
      %188 = tpu.matmul %184, %187, %cst_46 {dimension_numbers = #tpu.dot_dimension_numbers<[1], [0], [0], [1], [0, 0, 1, 1], [], []>} : vector<16x32xf32>, vector<32x128xf32>, vector<16x128xf32> -> vector<16x128xf32>
      %189 = vector.shape_cast %61 : vector<128xf32> to vector<1x128xf32>
      %190 = vector.broadcast %189 : vector<1x128xf32> to vector<16x128xf32>
      %191 = arith.addf %188, %190 : vector<16x128xf32>
      %cst_47 = arith.constant 1.702000e+00 : f32
      %192 = vector.broadcast %cst_47 : f32 to vector<16x128xf32>
      %193 = arith.mulf %192, %191 : vector<16x128xf32>
      %194 = arith.negf %193 : vector<16x128xf32>
      %195 = math.exp %194 : vector<16x128xf32>
      %cst_48 = arith.constant 1.000000e+00 : f32
      %196 = vector.broadcast %cst_48 : f32 to vector<16x128xf32>
      %197 = arith.addf %196, %195 : vector<16x128xf32>
      %198 = arith.divf %196, %197 : vector<16x128xf32>
      %199 = arith.mulf %191, %198 : vector<16x128xf32>
      %200 = arith.index_cast %arg12 : i32 to index
      %c0_49 = arith.constant 0 : index
      %c0_50 = arith.constant 0 : index
      %201 = vector.load %arg6[%200, %c0_49, %c0_50] : memref<2x128x32xf32, #tpu.memory_space<vmem>>, vector<1x128x32xf32>
      %202 = vector.shape_cast %201 : vector<1x128x32xf32> to vector<128x32xf32>
      %cst_51 = arith.constant dense<0.000000e+00> : vector<16x32xf32>
      %203 = tpu.matmul %199, %202, %cst_51 {dimension_numbers = #tpu.dot_dimension_numbers<[1], [0], [0], [1], [0, 0, 1, 1], [], []>} : vector<16x128xf32>, vector<128x32xf32>, vector<16x32xf32> -> vector<16x32xf32>
      %204 = arith.addf %160, %203 : vector<16x32xf32>
      %205 = vector.shape_cast %63 : vector<32xf32> to vector<1x32xf32>
      %206 = vector.broadcast %205 : vector<1x32xf32> to vector<16x32xf32>
      %207 = arith.addf %204, %206 : vector<16x32xf32>
      scf.yield %207 : vector<16x32xf32>
    }
    %c2_i32_1 = arith.constant 2 : i32
    %c0_2 = arith.constant 0 : index
    %c0_3 = arith.constant 0 : index
    %6 = vector.load %arg8[%c0_2, %c0_3] : memref<2x32xf32, #tpu.memory_space<vmem>>, vector<1x32xf32>
    %7 = vector.shape_cast %6 : vector<1x32xf32> to vector<32xf32>
    %c1 = arith.constant 1 : index
    %c0_4 = arith.constant 0 : index
    %8 = vector.load %arg8[%c1, %c0_4] : memref<2x32xf32, #tpu.memory_space<vmem>>, vector<1x32xf32>
    %9 = vector.shape_cast %8 : vector<1x32xf32> to vector<32xf32>
    %cst = arith.constant dense<0.000000e+00> : vector<16xf32>
    %10 = vector.multi_reduction <add>, %5, %cst [1] : vector<16x32xf32> to vector<16xf32>
    %11 = vector.shape_cast %10 : vector<16xf32> to vector<16x1xf32>
    %cst_5 = arith.constant 3.200000e+01 : f32
    %12 = vector.broadcast %cst_5 : f32 to vector<16x1xf32>
    %13 = arith.divf %11, %12 : vector<16x1xf32>
    %14 = vector.broadcast %13 : vector<16x1xf32> to vector<16x32xf32>
    %15 = arith.subf %5, %14 : vector<16x32xf32>
    %16 = arith.mulf %15, %15 : vector<16x32xf32>
    %cst_6 = arith.constant dense<0.000000e+00> : vector<16xf32>
    %17 = vector.multi_reduction <add>, %16, %cst_6 [1] : vector<16x32xf32> to vector<16xf32>
    %18 = vector.shape_cast %17 : vector<16xf32> to vector<16x1xf32>
    %cst_7 = arith.constant 3.200000e+01 : f32
    %19 = vector.broadcast %cst_7 : f32 to vector<16x1xf32>
    %20 = arith.divf %18, %19 : vector<16x1xf32>
    %21 = vector.broadcast %13 : vector<16x1xf32> to vector<16x32xf32>
    %22 = arith.subf %5, %21 : vector<16x32xf32>
    %cst_8 = arith.constant 9.99999974E-6 : f32
    %23 = vector.broadcast %cst_8 : f32 to vector<16x1xf32>
    %24 = arith.addf %20, %23 : vector<16x1xf32>
    %25 = math.rsqrt %24 : vector<16x1xf32>
    %26 = vector.broadcast %25 : vector<16x1xf32> to vector<16x32xf32>
    %27 = arith.mulf %22, %26 : vector<16x32xf32>
    %28 = vector.shape_cast %7 : vector<32xf32> to vector<1x32xf32>
    %29 = vector.broadcast %28 : vector<1x32xf32> to vector<16x32xf32>
    %30 = arith.mulf %27, %29 : vector<16x32xf32>
    %31 = vector.shape_cast %9 : vector<32xf32> to vector<1x32xf32>
    %32 = vector.broadcast %31 : vector<1x32xf32> to vector<16x32xf32>
    %33 = arith.addf %30, %32 : vector<16x32xf32>
    %c0_9 = arith.constant 0 : index
    %c0_10 = arith.constant 0 : index
    %34 = vector.load %arg10[%c0_9, %c0_10] : memref<16x32xf32, #tpu.memory_space<vmem>>, vector<16x32xf32>
    tpu.vector_store %arg10[%c0_9, %c0_10], %33 {strides = array<i32>} : memref<16x32xf32, #tpu.memory_space<vmem>>, vector<16x32xf32>,
    %c0_11 = arith.constant 0 : index
    %35 = memref.load %arg1[%c0_11] : memref<2xi32, #tpu.memory_space<smem>>
    %36 = arith.index_cast %35 : i32 to index
    %c0_12 = arith.constant 0 : index
    %37 = vector.load %arg10[%36, %c0_12] : memref<16x32xf32, #tpu.memory_space<vmem>>, vector<1x32xf32>
    %c1_13 = arith.constant 1 : index
    %38 = memref.load %arg1[%c1_13] : memref<2xi32, #tpu.memory_space<smem>>
    %39 = arith.index_cast %38 : i32 to index
    %c0_14 = arith.constant 0 : index
    %40 = vector.load %arg10[%39, %c0_14] : memref<16x32xf32, #tpu.memory_space<vmem>>, vector<1x32xf32>
    %41 = tpu.concatenate %37, %40 in 0 : vector<1x32xf32>, vector<1x32xf32> -> vector<2x32xf32>
    %c0_15 = arith.constant 0 : index
    %c0_16 = arith.constant 0 : index
    %42 = vector.load %arg9[%c0_15, %c0_16] : memref<32x32xf32, #tpu.memory_space<vmem>>, vector<32x32xf32>
    %cst_17 = arith.constant dense<0.000000e+00> : vector<2x32xf32>
    %43 = tpu.matmul %41, %42, %cst_17 {dimension_numbers = #tpu.dot_dimension_numbers<[1], [0], [0], [1], [0, 0, 1, 1], [], []>} : vector<2x32xf32>, vector<32x32xf32>, vector<2x32xf32> -> vector<2x32xf32>
    %c0_18 = arith.constant 0 : index
    %c0_19 = arith.constant 0 : index
    %44 = vector.load %arg11[%c0_18, %c0_19] : memref<2x32xf32, #tpu.memory_space<vmem>>, vector<2x32xf32>
    tpu.vector_store %arg11[%c0_18, %c0_19], %43 {strides = array<i32>} : memref<2x32xf32, #tpu.memory_space<vmem>>, vector<2x32xf32>,
    return
  }
  func.func @transform_0(%arg0: i32, %arg1: memref<2xi32, #tpu.memory_space<smem>>) -> (i32, i32) {
    %c0_i32 = arith.constant 0 : i32
    %c0_i32_0 = arith.constant 0 : i32
    %c0_i32_1 = arith.constant 0 : i32
    return %c0_i32, %c0_i32_0 : i32, i32
  }
  func.func @transform_1(%arg0: i32, %arg1: memref<2xi32, #tpu.memory_space<smem>>) -> (i32, i32, i32) {
    %c0_i32 = arith.constant 0 : i32
    %c0_i32_0 = arith.constant 0 : i32
    %c0_i32_1 = arith.constant 0 : i32
    %c0_i32_2 = arith.constant 0 : i32
    return %c0_i32, %c0_i32_0, %c0_i32_1 : i32, i32, i32
  }
  func.func @transform_2(%arg0: i32, %arg1: memref<2xi32, #tpu.memory_space<smem>>) -> (i32, i32, i32) {
    %c0_i32 = arith.constant 0 : i32
    %c0_i32_0 = arith.constant 0 : i32
    %c0_i32_1 = arith.constant 0 : i32
    %c0_i32_2 = arith.constant 0 : i32
    return %c0_i32, %c0_i32_0, %c0_i32_1 : i32, i32, i32
  }
  func.func @transform_3(%arg0: i32, %arg1: memref<2xi32, #tpu.memory_space<smem>>) -> (i32, i32, i32) {
    %c0_i32 = arith.constant 0 : i32
    %c0_i32_0 = arith.constant 0 : i32
    %c0_i32_1 = arith.constant 0 : i32
    %c0_i32_2 = arith.constant 0 : i32
    return %c0_i32, %c0_i32_0, %c0_i32_1 : i32, i32, i32
  }
  func.func @transform_4(%arg0: i32, %arg1: memref<2xi32, #tpu.memory_space<smem>>) -> (i32, i32, i32) {
    %c0_i32 = arith.constant 0 : i32
    %c0_i32_0 = arith.constant 0 : i32
    %c0_i32_1 = arith.constant 0 : i32
    %c0_i32_2 = arith.constant 0 : i32
    return %c0_i32, %c0_i32_0, %c0_i32_1 : i32, i32, i32
  }
  func.func @transform_5(%arg0: i32, %arg1: memref<2xi32, #tpu.memory_space<smem>>) -> (i32, i32, i32) {
    %c0_i32 = arith.constant 0 : i32
    %c0_i32_0 = arith.constant 0 : i32
    %c0_i32_1 = arith.constant 0 : i32
    %c0_i32_2 = arith.constant 0 : i32
    return %c0_i32, %c0_i32_0, %c0_i32_1 : i32, i32, i32
  }
  func.func @transform_6(%arg0: i32, %arg1: memref<2xi32, #tpu.memory_space<smem>>) -> (i32, i32) {
    %c0_i32 = arith.constant 0 : i32
    %c0_i32_0 = arith.constant 0 : i32
    %c0_i32_1 = arith.constant 0 : i32
    return %c0_i32, %c0_i32_0 : i32, i32
  }
  func.func @transform_7(%arg0: i32, %arg1: memref<2xi32, #tpu.memory_space<smem>>) -> (i32, i32) {
    %c0_i32 = arith.constant 0 : i32
    %c0_i32_0 = arith.constant 0 : i32
    %c0_i32_1 = arith.constant 0 : i32
    return %c0_i32, %c0_i32_0 : i32, i32
  }
  func.func @transform_8(%arg0: i32, %arg1: memref<2xi32, #tpu.memory_space<smem>>) -> (i32, i32) {
    %c0_i32 = arith.constant 0 : i32
    %c0_i32_0 = arith.constant 0 : i32
    %c0_i32_1 = arith.constant 0 : i32
    return %c0_i32, %c0_i32_0 : i32, i32
  }
  func.func @transform_9(%arg0: i32, %arg1: memref<2xi32, #tpu.memory_space<smem>>) -> (i32, i32) {
    %c0_i32 = arith.constant 0 : i32
    %c0_i32_0 = arith.constant 0 : i32
    %c0_i32_1 = arith.constant 0 : i32
    return %c0_i32, %c0_i32_0 : i32, i32
  }
}

</mosaic_0001>

<llo_original>
// kernel: clip_text_forward.1
$region0: #{clip_text_forward.1}
  #allocation0 [shape = 'u32[]', space=smem, size = 0x4, offset = 0x4, fixed_abs, tag = 'smem constant byte address 0x4 - core index']
  #allocation1 [shape = 'u32[144,128]{1,0:T(1,128)}', space=vmem, size = 0x12000, scoped, tag = 'internal scratch']
  #allocation2 [shape = 's32[1]{0}', space=sflag, size = 0x4, scoped, tag = 'scoped memory for clip_text_forward.1']
  #allocation3 [shape = 'u8[512]{0}', space=smem, size = 0x200, scoped, tag = 'prefetched SMEM operand 0']
  %s0 = inlined_call_operand.vmem [shape: s32[2], index: 0, kind: input, shape index: {}]
  %s1 = inlined_call_operand.vmem [shape: f32[16,32], index: 1, kind: input, shape index: {}]
  %s2 = inlined_call_operand.vmem [shape: f32[2,32,96], index: 2, kind: input, shape index: {}]
  %s3 = inlined_call_operand.vmem [shape: f32[2,32,32], index: 3, kind: input, shape index: {}]
  %s4 = inlined_call_operand.vmem [shape: f32[2,32,128], index: 4, kind: input, shape index: {}]
  %s5 = inlined_call_operand.vmem [shape: f32[2,128,32], index: 5, kind: input, shape index: {}]
  %s6 = inlined_call_operand.vmem [shape: f32[2,8,128], index: 6, kind: input, shape index: {}]
  %s7 = inlined_call_operand.vmem [shape: f32[2,32], index: 7, kind: input, shape index: {}]
  %s8 = inlined_call_operand.vmem [shape: f32[32,32], index: 8, kind: input, shape index: {}]
  %s9 = inlined_call_operand.vmem [shape: f32[16,32], index: 9, kind: output, shape index: {0}]
  %s10 = inlined_call_operand.vmem [shape: f32[2,32], index: 10, kind: output, shape index: {1}]
  %11 = xla_tuple %s9, %s10
  %s12 = sld [smem:[#allocation0]]
  $region57: #{clip_text_forward.1} parent=0
    _
  %s14 = ssub.s32 1, %s12
  %s15 = scalar_select 0, %s14, %s12
  %s16 = sshll.u32 %s0, 4
  %s17 = int_to_ptr.vmem [resolvable:$true] %s16
  %19 = dma.vmem_to_smem %s17, 16, [#allocation3], [#allocation2]
  %20 = dma.done [#allocation2], 16
  %21 = sfence
  // Predicated region
  $region2: #{clip_text_forward.1} parent=0 // pred_check
    _
  $region3: #{clip_text_forward.1} parent=0 // pred_check_branch
    %23 = sbr.rel (0) target = $region5
  $region4: #{clip_text_forward.1} parent=0 // pred_region
    _
  $region5: #{clip_text_forward.1} parent=0 // pred_fallthru
    _
  // Predicated region
  $region6: #{clip_text_forward.1} parent=0 // pred_check
    _
  $region7: #{clip_text_forward.1} parent=0 // pred_check_branch
    %25 = sbr.rel (0) target = $region9
  $region8: #{clip_text_forward.1} parent=0 // pred_region
    _
  $region9: #{clip_text_forward.1} parent=0 // pred_fallthru
    _
  // Predicated region
  $region10: #{clip_text_forward.1} parent=0 // pred_check
    _
  $region11: #{clip_text_forward.1} parent=0 // pred_check_branch
    %27 = sbr.rel (0) target = $region13
  $region12: #{clip_text_forward.1} parent=0 // pred_region
    _
  $region13: #{clip_text_forward.1} parent=0 // pred_fallthru
    _
  // Predicated region
  $region14: #{clip_text_forward.1} parent=0 // pred_check
    _
  $region15: #{clip_text_forward.1} parent=0 // pred_check_branch
    %29 = sbr.rel (0) target = $region17
  $region16: #{clip_text_forward.1} parent=0 // pred_region
    _
  $region17: #{clip_text_forward.1} parent=0 // pred_fallthru
    _
  // Predicated region
  $region18: #{clip_text_forward.1} parent=0 // pred_check
    _
  $region19: #{clip_text_forward.1} parent=0 // pred_check_branch
    %31 = sbr.rel (0) target = $region21
  $region20: #{clip_text_forward.1} parent=0 // pred_region
    _
  $region21: #{clip_text_forward.1} parent=0 // pred_fallthru
    _
  // Predicated region
  $region22: #{clip_text_forward.1} parent=0 // pred_check
    _
  $region23: #{clip_text_forward.1} parent=0 // pred_check_branch
    %33 = sbr.rel (0) target = $region25
  $region24: #{clip_text_forward.1} parent=0 // pred_region
    _
  $region25: #{clip_text_forward.1} parent=0 // pred_fallthru
    _
  // Predicated region
  $region26: #{clip_text_forward.1} parent=0 // pred_check
    _
  $region27: #{clip_text_forward.1} parent=0 // pred_check_branch
    %35 = sbr.rel (0) target = $region29
  $region28: #{clip_text_forward.1} parent=0 // pred_region
    _
  $region29: #{clip_text_forward.1} parent=0 // pred_fallthru
    _
  // Predicated region
  $region30: #{clip_text_forward.1} parent=0 // pred_check
    _
  $region31: #{clip_text_forward.1} parent=0 // pred_check_branch
    %37 = sbr.rel (0) target = $region33
  $region32: #{clip_text_forward.1} parent=0 // pred_region
    _
  $region33: #{clip_text_forward.1} parent=0 // pred_fallthru
    _
  %v38 = vlaneseq
  %v39 = vshrl.u32 %v38, 7
  %v40 = vlaneseq
  %v41 = vand.u32 %v40, 127
  %vm42 = vcmp.ge.s32.totalorder %v39, %v41
  %v43 = vld [vmem:[%s1] sm:$0xff]
  %v44 = vld [vmem:[%s1 + $0x8] sm:$0xff]
  loop: start=0, step=1, limit=2
  $region34: #{clip_text_forward.1} parent=0 // loop_pre_header
    _
  $region35: #{clip_text_forward.1} parent=0 // loop_header
    %s46 = sphi 0, %s50
    %p47 = scmp.ge.s32.totalorder %s46, 2
    %v51 = vphi %v43, %v1893
    %v52 = vphi %v44, %v1894
  $region36: #{clip_text_forward.1} parent=0 // loop_header_branch
    %49 = sbr.rel (%p47) target = $region40
  $region37: #{clip_text_forward.1} parent=0 // loop_body
    %s53 = smul.u32 %s46, 8
    %s54 = scalar_lea.vmem %s6, %s53
    %v55 = vld [vmem:[%s54] sm:$0xff]
    %vm56 = vcmask 261120
    %v57 = vsel %vm56, %v51, 0.0
    %58 = vadd.xlane.f32.xlu0 %v57
    %v59 = vpop.xlane.xlu0 %58
    %v60 = vsel %vm56, %v52, 0.0
    %61 = vadd.xlane.f32.xlu0 %v60
    %v62 = vpop.xlane.xlu0 %61
    %v63 = vrcp.pop 32.0
    %v64 = vmul.f32 %v59, %v63
    %v65 = vmul.f32 %v62, %v63
    %v66 = vsub.f32 %v51, %v64
    %v67 = vsub.f32 %v52, %v65
    %v68 = vmul.f32 %v66, %v66
    %v69 = vmul.f32 %v67, %v67
    %v70 = vsel %vm56, %v68, 0.0
    %71 = vadd.xlane.f32.xlu0 %v70
    %v72 = vpop.xlane.xlu0 %71
    %v73 = vsel %vm56, %v69, 0.0
    %74 = vadd.xlane.f32.xlu0 %v73
    %v75 = vpop.xlane.xlu0 %74
    %v76 = vmul.f32 %v72, %v63
    %v77 = vmul.f32 %v75, %v63
    %v78 = vadd.f32 %v76, 1e-05
    %v79 = vadd.f32 %v77, 1e-05
    %v80 = vrsqrt.pop %v78
    %v81 = vrsqrt.pop %v79
    %v82 = vmul.f32 %v66, %v80
    %v83 = vmul.f32 %v67, %v81
    %v84 = vlaneseq
    %v85 = vshrl.u32 %v84, 7
    %v86 = vsub.s32 0, %v85
    %v87 = vrot.slane %v55, %v86
    %v88 = vmul.f32 %v82, %v87
    %v89 = vmul.f32 %v83, %v87
    %v90 = vlaneseq
    %v91 = vshrl.u32 %v90, 7
    %v92 = vsub.s32 1, %v91
    %v93 = vrot.slane %v55, %v92
    %v94 = vadd.f32 %v88, %v93
    %v95 = vadd.f32 %v89, %v93
    %s96 = smul.u32 %s46, 32
    %s97 = scalar_lea.vmem %s2, %s96
    %v98 = vld [vmem:[%s97] sm:$0xff]
    %v99 = vld [vmem:[%s97 + $0x8] sm:$0xff]
    %v100 = vld [vmem:[%s97 + $0x10] sm:$0xff]
    %v101 = vld [vmem:[%s97 + $0x18] sm:$0xff]
    %v102 = vlaneseq
    %v103 = vshrl.u32 %v102, 7
    %v104 = vsub.s32 2, %v103
    %v105 = vrot.slane %v55, %v104
    %v107 = vsel %vm56, %v94, 0
    %v110 = vsel %vm56, %v95, 0
    %112 = vmatprep.subr.mxu0 0.0
    %113 = vmatpush1.msra.mxu0 %v98
    %114 = vmatprep.subr.mxu0 0.0
    %115 = vmatpush1.msra.mxu0 %v99
    %116 = vmatprep.subr.mxu0 0.0
    %117 = vmatpush1.msra.mxu0 %v100
    %118 = vmatprep.subr.mxu0 0.0
    %119 = vmatpush1.msra.mxu0 %v101
    %120 = vmatprep.subr.mxu0 0.0
    %121 = vmatpush1.msra.mxu0 0.0
    %122 = vmatprep.subr.mxu0 0.0
    %123 = vmatpush1.msra.mxu0 0.0
    %124 = vmatprep.subr.mxu0 0.0
    %125 = vmatpush1.msra.mxu0 0.0
    %126 = vmatprep.subr.mxu0 0.0
    %127 = vmatpush1.msra.mxu0 0.0
    %128 = vmatprep.subr.mxu0 0.0
    %129 = vmatpush1.msra.mxu0 0.0
    %130 = vmatprep.subr.mxu0 0.0
    %131 = vmatpush1.msra.mxu0 0.0
    %132 = vmatprep.subr.mxu0 0.0
    %133 = vmatpush1.msra.mxu0 0.0
    %134 = vmatprep.subr.mxu0 0.0
    %135 = vmatpush1.msra.mxu0 0.0
    %136 = vmatprep.subr.mxu0 0.0
    %137 = vmatpush1.msra.mxu0 0.0
    %138 = vmatprep.subr.mxu0 0.0
    %139 = vmatpush1.msra.mxu0 0.0
    %140 = vmatprep.subr.mxu0 0.0
    %141 = vmatpush1.msra.mxu0 0.0
    %142 = vmatprep.subr.mxu0 0.0
    %143 = vmatpush1.msra.mxu0 0.0
    %144 = vmatprep.subr.mxu0 0.0
    %145 = vmatpush1.msra.mxu0 0.0
    %146 = vmatprep.subr.mxu0 0.0
    %147 = vmatpush1.msra.mxu0 0.0
    %148 = vmatprep.subr.mxu0 0.0
    %149 = vmatpush1.msra.mxu0 0.0
    %150 = vmatprep.subr.mxu0 0.0
    %151 = vmatpush1.msra.mxu0 0.0
    %152 = vmatprep.subr.mxu0 0.0
    %153 = vmatpush1.msra.mxu0 0.0
    %154 = vmatprep.subr.mxu0 0.0
    %155 = vmatpush1.msra.mxu0 0.0
    %156 = vmatprep.subr.mxu0 0.0
    %157 = vmatpush1.msra.mxu0 0.0
    %158 = vmatprep.subr.mxu0 0.0
    %159 = vmatpush1.msra.mxu0 0.0
    %160 = vmatprep.subr.mxu0 0.0
    %161 = vmatpush1.msra.mxu0 0.0
    %162 = vmatprep.subr.mxu0 0.0
    %163 = vmatpush1.msra.mxu0 0.0
    %164 = vmatprep.subr.mxu0 0.0
    %165 = vmatpush1.msra.mxu0 0.0
    %166 = vmatprep.subr.mxu0 0.0
    %167 = vmatpush1.msra.mxu0 0.0
    %168 = vmatprep.subr.mxu0 0.0
    %169 = vmatpush1.msra.mxu0 0.0
    %170 = vmatprep.subr.mxu0 0.0
    %171 = vmatpush1.msra.mxu0 0.0
    %172 = vmatprep.subr.mxu0 0.0
    %173 = vmatpush1.msra.mxu0 0.0
    %174 = vmatprep.subr.mxu0 0.0
    %175 = vmatpush1.msra.mxu0 0.0
    %176 = vmatprep.mubr.f32.mxu0 0.0
    %177 = vmatmul.mubr.f32.gmra.mrb[0].mxu0 %v107
    %v178 = vpop.f32.mrb[0].mxu0
    %v179 = vadd.f32 %v105, %v178
    %v180 = vpop.f32.mrb[0].mxu0
    %181 = vmatprep.mubr.f32.mxu0 0.0
    %182 = vmatmul.mubr.f32.gmra.mrb[0].mxu0 %v110
    %v183 = vpop.f32.mrb[0].mxu0
    %v184 = vadd.f32 %v105, %v183
    %v185 = vpop.f32.mrb[0].mxu0
    %186 = vdwg.mxu0
    %189 = vrot.lane.b32.xlu0 %v179, 120
    %v190 = vpop.permute.xlu0 %189
    %191 = vrot.lane.b32.xlu0 %v184, 120
    %v192 = vpop.permute.xlu0 %191
    %193 = vrot.lane.b32.xlu0 %v179, 112
    %v194 = vpop.permute.xlu0 %193
    %195 = vrot.lane.b32.xlu0 %v184, 112
    %v196 = vpop.permute.xlu0 %195
    %197 = vrot.lane.b32.xlu0 %v179, 104
    %v198 = vpop.permute.xlu0 %197
    %199 = vrot.lane.b32.xlu0 %v184, 104
    %v200 = vpop.permute.xlu0 %199
    %201 = vrot.lane.b32.xlu0 %v179, 96
    %v202 = vpop.permute.xlu0 %201
    %vm203 = vcmask 64512
    %v204 = vsel %vm203, %v179, 0
    %v206 = vsel %vm203, %v202, 0
    %208 = vmatprep.subr.mxu0 0.0
    %209 = vmatpush1.xpose.msra.mxu0 %v206
    %210 = vmatprep.subr.mxu0 0.0
    %211 = vmatpush1.xpose.msra.mxu0 0.0
    %212 = vmatprep.subr.mxu0 0.0
    %213 = vmatpush1.xpose.msra.mxu0 0.0
    %214 = vmatprep.subr.mxu0 0.0
    %215 = vmatpush1.xpose.msra.mxu0 0.0
    %216 = vmatprep.subr.mxu0 0.0
    %217 = vmatpush1.xpose.msra.mxu0 0.0
    %218 = vmatprep.subr.mxu0 0.0
    %219 = vmatpush1.xpose.msra.mxu0 0.0
    %220 = vmatprep.subr.mxu0 0.0
    %221 = vmatpush1.xpose.msra.mxu0 0.0
    %222 = vmatprep.subr.mxu0 0.0
    %223 = vmatpush1.xpose.msra.mxu0 0.0
    %224 = vmatprep.subr.mxu0 0.0
    %225 = vmatpush1.xpose.msra.mxu0 0.0
    %226 = vmatprep.subr.mxu0 0.0
    %227 = vmatpush1.xpose.msra.mxu0 0.0
    %228 = vmatprep.subr.mxu0 0.0
    %229 = vmatpush1.xpose.msra.mxu0 0.0
    %230 = vmatprep.subr.mxu0 0.0
    %231 = vmatpush1.xpose.msra.mxu0 0.0
    %232 = vmatprep.subr.mxu0 0.0
    %233 = vmatpush1.xpose.msra.mxu0 0.0
    %234 = vmatprep.subr.mxu0 0.0
    %235 = vmatpush1.xpose.msra.mxu0 0.0
    %236 = vmatprep.subr.mxu0 0.0
    %237 = vmatpush1.xpose.msra.mxu0 0.0
    %238 = vmatprep.subr.mxu0 0.0
    %239 = vmatpush1.xpose.msra.mxu0 0.0
    %240 = vmatprep.subr.mxu0 0.0
    %241 = vmatpush1.xpose.msra.mxu0 0.0
    %242 = vmatprep.subr.mxu0 0.0
    %243 = vmatpush1.xpose.msra.mxu0 0.0
    %244 = vmatprep.subr.mxu0 0.0
    %245 = vmatpush1.xpose.msra.mxu0 0.0
    %246 = vmatprep.subr.mxu0 0.0
    %247 = vmatpush1.xpose.msra.mxu0 0.0
    %248 = vmatprep.subr.mxu0 0.0
    %249 = vmatpush1.xpose.msra.mxu0 0.0
    %250 = vmatprep.subr.mxu0 0.0
    %251 = vmatpush1.xpose.msra.mxu0 0.0
    %252 = vmatprep.subr.mxu0 0.0
    %253 = vmatpush1.xpose.msra.mxu0 0.0
    %254 = vmatprep.subr.mxu0 0.0
    %255 = vmatpush1.xpose.msra.mxu0 0.0
    %256 = vmatprep.subr.mxu0 0.0
    %257 = vmatpush1.xpose.msra.mxu0 0.0
    %258 = vmatprep.subr.mxu0 0.0
    %259 = vmatpush1.xpose.msra.mxu0 0.0
    %260 = vmatprep.subr.mxu0 0.0
    %261 = vmatpush1.xpose.msra.mxu0 0.0
    %262 = vmatprep.subr.mxu0 0.0
    %263 = vmatpush1.xpose.msra.mxu0 0.0
    %264 = vmatprep.subr.mxu0 0.0
    %265 = vmatpush1.xpose.msra.mxu0 0.0
    %266 = vmatprep.subr.mxu0 0.0
    %267 = vmatpush1.xpose.msra.mxu0 0.0
    %268 = vmatprep.subr.mxu0 0.0
    %269 = vmatpush1.xpose.msra.mxu0 0.0
    %270 = vmatprep.subr.mxu0 0.0
    %271 = vmatpush1.xpose.msra.mxu0 0.0
    %272 = vmatprep.mubr.f32.mxu0 0.0
    %273 = vmatmul.mubr.f32.gmra.mrb[0].mxu0 %v204
    %v274 = vpop.f32.mrb[0].mxu0
    %v275 = vadd.f32 0.0, %v274
    %v276 = vpop.f32.mrb[0].mxu0
    %277 = vdwg.mxu0
    %278 = vrot.lane.b32.xlu0 %v184, 96
    %v279 = vpop.permute.xlu0 %278
    %v280 = vsel %vm203, %v184, 0
    %v282 = vsel %vm203, %v279, 0
    %284 = vmatprep.subr.mxu0 0.0
    %285 = vmatpush1.xpose.msra.mxu0 %v282
    %286 = vmatprep.subr.mxu0 0.0
    %287 = vmatpush1.xpose.msra.mxu0 0.0
    %288 = vmatprep.subr.mxu0 0.0
    %289 = vmatpush1.xpose.msra.mxu0 0.0
    %290 = vmatprep.subr.mxu0 0.0
    %291 = vmatpush1.xpose.msra.mxu0 0.0
    %292 = vmatprep.subr.mxu0 0.0
    %293 = vmatpush1.xpose.msra.mxu0 0.0
    %294 = vmatprep.subr.mxu0 0.0
    %295 = vmatpush1.xpose.msra.mxu0 0.0
    %296 = vmatprep.subr.mxu0 0.0
    %297 = vmatpush1.xpose.msra.mxu0 0.0
    %298 = vmatprep.subr.mxu0 0.0
    %299 = vmatpush1.xpose.msra.mxu0 0.0
    %300 = vmatprep.subr.mxu0 0.0
    %301 = vmatpush1.xpose.msra.mxu0 0.0
    %302 = vmatprep.subr.mxu0 0.0
    %303 = vmatpush1.xpose.msra.mxu0 0.0
    %304 = vmatprep.subr.mxu0 0.0
    %305 = vmatpush1.xpose.msra.mxu0 0.0
    %306 = vmatprep.subr.mxu0 0.0
    %307 = vmatpush1.xpose.msra.mxu0 0.0
    %308 = vmatprep.subr.mxu0 0.0
    %309 = vmatpush1.xpose.msra.mxu0 0.0
    %310 = vmatprep.subr.mxu0 0.0
    %311 = vmatpush1.xpose.msra.mxu0 0.0
    %312 = vmatprep.subr.mxu0 0.0
    %313 = vmatpush1.xpose.msra.mxu0 0.0
    %314 = vmatprep.subr.mxu0 0.0
    %315 = vmatpush1.xpose.msra.mxu0 0.0
    %316 = vmatprep.subr.mxu0 0.0
    %317 = vmatpush1.xpose.msra.mxu0 0.0
    %318 = vmatprep.subr.mxu0 0.0
    %319 = vmatpush1.xpose.msra.mxu0 0.0
    %320 = vmatprep.subr.mxu0 0.0
    %321 = vmatpush1.xpose.msra.mxu0 0.0
    %322 = vmatprep.subr.mxu0 0.0
    %323 = vmatpush1.xpose.msra.mxu0 0.0
    %324 = vmatprep.subr.mxu0 0.0
    %325 = vmatpush1.xpose.msra.mxu0 0.0
    %326 = vmatprep.subr.mxu0 0.0
    %327 = vmatpush1.xpose.msra.mxu0 0.0
    %328 = vmatprep.subr.mxu0 0.0
    %329 = vmatpush1.xpose.msra.mxu0 0.0
    %330 = vmatprep.subr.mxu0 0.0
    %331 = vmatpush1.xpose.msra.mxu0 0.0
    %332 = vmatprep.subr.mxu0 0.0
    %333 = vmatpush1.xpose.msra.mxu0 0.0
    %334 = vmatprep.subr.mxu0 0.0
    %335 = vmatpush1.xpose.msra.mxu0 0.0
    %336 = vmatprep.subr.mxu0 0.0
    %337 = vmatpush1.xpose.msra.mxu0 0.0
    %338 = vmatprep.subr.mxu0 0.0
    %339 = vmatpush1.xpose.msra.mxu0 0.0
    %340 = vmatprep.subr.mxu0 0.0
    %341 = vmatpush1.xpose.msra.mxu0 0.0
    %342 = vmatprep.subr.mxu0 0.0
    %343 = vmatpush1.xpose.msra.mxu0 0.0
    %344 = vmatprep.subr.mxu0 0.0
    %345 = vmatpush1.xpose.msra.mxu0 0.0
    %346 = vmatprep.subr.mxu0 0.0
    %347 = vmatpush1.xpose.msra.mxu0 0.0
    %348 = vmatprep.mubr.f32.mxu0 0.0
    %349 = vmatmul.mubr.f32.gmra.mrb[0].mxu0 %v280
    %v350 = vpop.f32.mrb[0].mxu0
    %v351 = vadd.f32 0.0, %v350
    %v352 = vpop.f32.mrb[0].mxu0
    %353 = vdwg.mxu0
    %354 = vrot.lane.b32.xlu0 %v190, 96
    %v355 = vpop.permute.xlu0 %354
    %v356 = vsel %vm203, %v190, 0
    %v358 = vsel %vm203, %v355, 0
    %360 = vmatprep.subr.mxu0 0.0
    %361 = vmatpush1.xpose.msra.mxu0 %v358
    %362 = vmatprep.subr.mxu0 0.0
    %363 = vmatpush1.xpose.msra.mxu0 0.0
    %364 = vmatprep.subr.mxu0 0.0
    %365 = vmatpush1.xpose.msra.mxu0 0.0
    %366 = vmatprep.subr.mxu0 0.0
    %367 = vmatpush1.xpose.msra.mxu0 0.0
    %368 = vmatprep.subr.mxu0 0.0
    %369 = vmatpush1.xpose.msra.mxu0 0.0
    %370 = vmatprep.subr.mxu0 0.0
    %371 = vmatpush1.xpose.msra.mxu0 0.0
    %372 = vmatprep.subr.mxu0 0.0
    %373 = vmatpush1.xpose.msra.mxu0 0.0
    %374 = vmatprep.subr.mxu0 0.0
    %375 = vmatpush1.xpose.msra.mxu0 0.0
    %376 = vmatprep.subr.mxu0 0.0
    %377 = vmatpush1.xpose.msra.mxu0 0.0
    %378 = vmatprep.subr.mxu0 0.0
    %379 = vmatpush1.xpose.msra.mxu0 0.0
    %380 = vmatprep.subr.mxu0 0.0
    %381 = vmatpush1.xpose.msra.mxu0 0.0
    %382 = vmatprep.subr.mxu0 0.0
    %383 = vmatpush1.xpose.msra.mxu0 0.0
    %384 = vmatprep.subr.mxu0 0.0
    %385 = vmatpush1.xpose.msra.mxu0 0.0
    %386 = vmatprep.subr.mxu0 0.0
    %387 = vmatpush1.xpose.msra.mxu0 0.0
    %388 = vmatprep.subr.mxu0 0.0
    %389 = vmatpush1.xpose.msra.mxu0 0.0
    %390 = vmatprep.subr.mxu0 0.0
    %391 = vmatpush1.xpose.msra.mxu0 0.0
    %392 = vmatprep.subr.mxu0 0.0
    %393 = vmatpush1.xpose.msra.mxu0 0.0
    %394 = vmatprep.subr.mxu0 0.0
    %395 = vmatpush1.xpose.msra.mxu0 0.0
    %396 = vmatprep.subr.mxu0 0.0
    %397 = vmatpush1.xpose.msra.mxu0 0.0
    %398 = vmatprep.subr.mxu0 0.0
    %399 = vmatpush1.xpose.msra.mxu0 0.0
    %400 = vmatprep.subr.mxu0 0.0
    %401 = vmatpush1.xpose.msra.mxu0 0.0
    %402 = vmatprep.subr.mxu0 0.0
    %403 = vmatpush1.xpose.msra.mxu0 0.0
    %404 = vmatprep.subr.mxu0 0.0
    %405 = vmatpush1.xpose.msra.mxu0 0.0
    %406 = vmatprep.subr.mxu0 0.0
    %407 = vmatpush1.xpose.msra.mxu0 0.0
    %408 = vmatprep.subr.mxu0 0.0
    %409 = vmatpush1.xpose.msra.mxu0 0.0
    %410 = vmatprep.subr.mxu0 0.0
    %411 = vmatpush1.xpose.msra.mxu0 0.0
    %412 = vmatprep.subr.mxu0 0.0
    %413 = vmatpush1.xpose.msra.mxu0 0.0
    %414 = vmatprep.subr.mxu0 0.0
    %415 = vmatpush1.xpose.msra.mxu0 0.0
    %416 = vmatprep.subr.mxu0 0.0
    %417 = vmatpush1.xpose.msra.mxu0 0.0
    %418 = vmatprep.subr.mxu0 0.0
    %419 = vmatpush1.xpose.msra.mxu0 0.0
    %420 = vmatprep.subr.mxu0 0.0
    %421 = vmatpush1.xpose.msra.mxu0 0.0
    %422 = vmatprep.subr.mxu0 0.0
    %423 = vmatpush1.xpose.msra.mxu0 0.0
    %424 = vmatprep.mubr.f32.mxu0 0.0
    %425 = vmatmul.mubr.f32.gmra.mrb[0].mxu0 %v356
    %v426 = vpop.f32.mrb[0].mxu0
    %v427 = vadd.f32 0.0, %v426
    %v428 = vpop.f32.mrb[0].mxu0
    %429 = vdwg.mxu0
    %430 = vrot.lane.b32.xlu0 %v192, 96
    %v431 = vpop.permute.xlu0 %430
    %v432 = vsel %vm203, %v192, 0
    %v434 = vsel %vm203, %v431, 0
    %436 = vmatprep.subr.mxu0 0.0
    %437 = vmatpush1.xpose.msra.mxu0 %v434
    %438 = vmatprep.subr.mxu0 0.0
    %439 = vmatpush1.xpose.msra.mxu0 0.0
    %440 = vmatprep.subr.mxu0 0.0
    %441 = vmatpush1.xpose.msra.mxu0 0.0
    %442 = vmatprep.subr.mxu0 0.0
    %443 = vmatpush1.xpose.msra.mxu0 0.0
    %444 = vmatprep.subr.mxu0 0.0
    %445 = vmatpush1.xpose.msra.mxu0 0.0
    %446 = vmatprep.subr.mxu0 0.0
    %447 = vmatpush1.xpose.msra.mxu0 0.0
    %448 = vmatprep.subr.mxu0 0.0
    %449 = vmatpush1.xpose.msra.mxu0 0.0
    %450 = vmatprep.subr.mxu0 0.0
    %451 = vmatpush1.xpose.msra.mxu0 0.0
    %452 = vmatprep.subr.mxu0 0.0
    %453 = vmatpush1.xpose.msra.mxu0 0.0
    %454 = vmatprep.subr.mxu0 0.0
    %455 = vmatpush1.xpose.msra.mxu0 0.0
    %456 = vmatprep.subr.mxu0 0.0
    %457 = vmatpush1.xpose.msra.mxu0 0.0
    %458 = vmatprep.subr.mxu0 0.0
    %459 = vmatpush1.xpose.msra.mxu0 0.0
    %460 = vmatprep.subr.mxu0 0.0
    %461 = vmatpush1.xpose.msra.mxu0 0.0
    %462 = vmatprep.subr.mxu0 0.0
    %463 = vmatpush1.xpose.msra.mxu0 0.0
    %464 = vmatprep.subr.mxu0 0.0
    %465 = vmatpush1.xpose.msra.mxu0 0.0
    %466 = vmatprep.subr.mxu0 0.0
    %467 = vmatpush1.xpose.msra.mxu0 0.0
    %468 = vmatprep.subr.mxu0 0.0
    %469 = vmatpush1.xpose.msra.mxu0 0.0
    %470 = vmatprep.subr.mxu0 0.0
    %471 = vmatpush1.xpose.msra.mxu0 0.0
    %472 = vmatprep.subr.mxu0 0.0
    %473 = vmatpush1.xpose.msra.mxu0 0.0
    %474 = vmatprep.subr.mxu0 0.0
    %475 = vmatpush1.xpose.msra.mxu0 0.0
    %476 = vmatprep.subr.mxu0 0.0
    %477 = vmatpush1.xpose.msra.mxu0 0.0
    %478 = vmatprep.subr.mxu0 0.0
    %479 = vmatpush1.xpose.msra.mxu0 0.0
    %480 = vmatprep.subr.mxu0 0.0
    %481 = vmatpush1.xpose.msra.mxu0 0.0
    %482 = vmatprep.subr.mxu0 0.0
    %483 = vmatpush1.xpose.msra.mxu0 0.0
    %484 = vmatprep.subr.mxu0 0.0
    %485 = vmatpush1.xpose.msra.mxu0 0.0
    %486 = vmatprep.subr.mxu0 0.0
    %487 = vmatpush1.xpose.msra.mxu0 0.0
    %488 = vmatprep.subr.mxu0 0.0
    %489 = vmatpush1.xpose.msra.mxu0 0.0
    %490 = vmatprep.subr.mxu0 0.0
    %491 = vmatpush1.xpose.msra.mxu0 0.0
    %492 = vmatprep.subr.mxu0 0.0
    %493 = vmatpush1.xpose.msra.mxu0 0.0
    %494 = vmatprep.subr.mxu0 0.0
    %495 = vmatpush1.xpose.msra.mxu0 0.0
    %496 = vmatprep.subr.mxu0 0.0
    %497 = vmatpush1.xpose.msra.mxu0 0.0
    %498 = vmatprep.subr.mxu0 0.0
    %499 = vmatpush1.xpose.msra.mxu0 0.0
    %500 = vmatprep.mubr.f32.mxu0 0.0
    %501 = vmatmul.mubr.f32.gmra.mrb[0].mxu0 %v432
    %v502 = vpop.f32.mrb[0].mxu0
    %v503 = vadd.f32 0.0, %v502
    %v504 = vpop.f32.mrb[0].mxu0
    %505 = vdwg.mxu0
    %506 = vrot.lane.b32.xlu0 %v194, 96
    %v507 = vpop.permute.xlu0 %506
    %v508 = vsel %vm203, %v194, 0
    %v510 = vsel %vm203, %v507, 0
    %512 = vmatprep.subr.mxu0 0.0
    %513 = vmatpush1.xpose.msra.mxu0 %v510
    %514 = vmatprep.subr.mxu0 0.0
    %515 = vmatpush1.xpose.msra.mxu0 0.0
    %516 = vmatprep.subr.mxu0 0.0
    %517 = vmatpush1.xpose.msra.mxu0 0.0
    %518 = vmatprep.subr.mxu0 0.0
    %519 = vmatpush1.xpose.msra.mxu0 0.0
    %520 = vmatprep.subr.mxu0 0.0
    %521 = vmatpush1.xpose.msra.mxu0 0.0
    %522 = vmatprep.subr.mxu0 0.0
    %523 = vmatpush1.xpose.msra.mxu0 0.0
    %524 = vmatprep.subr.mxu0 0.0
    %525 = vmatpush1.xpose.msra.mxu0 0.0
    %526 = vmatprep.subr.mxu0 0.0
    %527 = vmatpush1.xpose.msra.mxu0 0.0
    %528 = vmatprep.subr.mxu0 0.0
    %529 = vmatpush1.xpose.msra.mxu0 0.0
    %530 = vmatprep.subr.mxu0 0.0
    %531 = vmatpush1.xpose.msra.mxu0 0.0
    %532 = vmatprep.subr.mxu0 0.0
    %533 = vmatpush1.xpose.msra.mxu0 0.0
    %534 = vmatprep.subr.mxu0 0.0
    %535 = vmatpush1.xpose.msra.mxu0 0.0
    %536 = vmatprep.subr.mxu0 0.0
    %537 = vmatpush1.xpose.msra.mxu0 0.0
    %538 = vmatprep.subr.mxu0 0.0
    %539 = vmatpush1.xpose.msra.mxu0 0.0
    %540 = vmatprep.subr.mxu0 0.0
    %541 = vmatpush1.xpose.msra.mxu0 0.0
    %542 = vmatprep.subr.mxu0 0.0
    %543 = vmatpush1.xpose.msra.mxu0 0.0
    %544 = vmatprep.subr.mxu0 0.0
    %545 = vmatpush1.xpose.msra.mxu0 0.0
    %546 = vmatprep.subr.mxu0 0.0
    %547 = vmatpush1.xpose.msra.mxu0 0.0
    %548 = vmatprep.subr.mxu0 0.0
    %549 = vmatpush1.xpose.msra.mxu0 0.0
    %550 = vmatprep.subr.mxu0 0.0
    %551 = vmatpush1.xpose.msra.mxu0 0.0
    %552 = vmatprep.subr.mxu0 0.0
    %553 = vmatpush1.xpose.msra.mxu0 0.0
    %554 = vmatprep.subr.mxu0 0.0
    %555 = vmatpush1.xpose.msra.mxu0 0.0
    %556 = vmatprep.subr.mxu0 0.0
    %557 = vmatpush1.xpose.msra.mxu0 0.0
    %558 = vmatprep.subr.mxu0 0.0
    %559 = vmatpush1.xpose.msra.mxu0 0.0
    %560 = vmatprep.subr.mxu0 0.0
    %561 = vmatpush1.xpose.msra.mxu0 0.0
    %562 = vmatprep.subr.mxu0 0.0
    %563 = vmatpush1.xpose.msra.mxu0 0.0
    %564 = vmatprep.subr.mxu0 0.0
    %565 = vmatpush1.xpose.msra.mxu0 0.0
    %566 = vmatprep.subr.mxu0 0.0
    %567 = vmatpush1.xpose.msra.mxu0 0.0
    %568 = vmatprep.subr.mxu0 0.0
    %569 = vmatpush1.xpose.msra.mxu0 0.0
    %570 = vmatprep.subr.mxu0 0.0
    %571 = vmatpush1.xpose.msra.mxu0 0.0
    %572 = vmatprep.subr.mxu0 0.0
    %573 = vmatpush1.xpose.msra.mxu0 0.0
    %574 = vmatprep.subr.mxu0 0.0
    %575 = vmatpush1.xpose.msra.mxu0 0.0
    %576 = vmatprep.mubr.f32.mxu0 0.0
    %577 = vmatmul.mubr.f32.gmra.mrb[0].mxu0 %v508
    %v578 = vpop.f32.mrb[0].mxu0
    %v579 = vadd.f32 0.0, %v578
    %v580 = vpop.f32.mrb[0].mxu0
    %581 = vdwg.mxu0
    %582 = vrot.lane.b32.xlu0 %v196, 96
    %v583 = vpop.permute.xlu0 %582
    %v584 = vsel %vm203, %v196, 0
    %v586 = vsel %vm203, %v583, 0
    %588 = vmatprep.subr.mxu0 0.0
    %589 = vmatpush1.xpose.msra.mxu0 %v586
    %590 = vmatprep.subr.mxu0 0.0
    %591 = vmatpush1.xpose.msra.mxu0 0.0
    %592 = vmatprep.subr.mxu0 0.0
    %593 = vmatpush1.xpose.msra.mxu0 0.0
    %594 = vmatprep.subr.mxu0 0.0
    %595 = vmatpush1.xpose.msra.mxu0 0.0
    %596 = vmatprep.subr.mxu0 0.0
    %597 = vmatpush1.xpose.msra.mxu0 0.0
    %598 = vmatprep.subr.mxu0 0.0
    %599 = vmatpush1.xpose.msra.mxu0 0.0
    %600 = vmatprep.subr.mxu0 0.0
    %601 = vmatpush1.xpose.msra.mxu0 0.0
    %602 = vmatprep.subr.mxu0 0.0
    %603 = vmatpush1.xpose.msra.mxu0 0.0
    %604 = vmatprep.subr.mxu0 0.0
    %605 = vmatpush1.xpose.msra.mxu0 0.0
    %606 = vmatprep.subr.mxu0 0.0
    %607 = vmatpush1.xpose.msra.mxu0 0.0
    %608 = vmatprep.subr.mxu0 0.0
    %609 = vmatpush1.xpose.msra.mxu0 0.0
    %610 = vmatprep.subr.mxu0 0.0
    %611 = vmatpush1.xpose.msra.mxu0 0.0
    %612 = vmatprep.subr.mxu0 0.0
    %613 = vmatpush1.xpose.msra.mxu0 0.0
    %614 = vmatprep.subr.mxu0 0.0
    %615 = vmatpush1.xpose.msra.mxu0 0.0
    %616 = vmatprep.subr.mxu0 0.0
    %617 = vmatpush1.xpose.msra.mxu0 0.0
    %618 = vmatprep.subr.mxu0 0.0
    %619 = vmatpush1.xpose.msra.mxu0 0.0
    %620 = vmatprep.subr.mxu0 0.0
    %621 = vmatpush1.xpose.msra.mxu0 0.0
    %622 = vmatprep.subr.mxu0 0.0
    %623 = vmatpush1.xpose.msra.mxu0 0.0
    %624 = vmatprep.subr.mxu0 0.0
    %625 = vmatpush1.xpose.msra.mxu0 0.0
    %626 = vmatprep.subr.mxu0 0.0
    %627 = vmatpush1.xpose.msra.mxu0 0.0
    %628 = vmatprep.subr.mxu0 0.0
    %629 = vmatpush1.xpose.msra.mxu0 0.0
    %630 = vmatprep.subr.mxu0 0.0
    %631 = vmatpush1.xpose.msra.mxu0 0.0
    %632 = vmatprep.subr.mxu0 0.0
    %633 = vmatpush1.xpose.msra.mxu0 0.0
    %634 = vmatprep.subr.mxu0 0.0
    %635 = vmatpush1.xpose.msra.mxu0 0.0
    %636 = vmatprep.subr.mxu0 0.0
    %637 = vmatpush1.xpose.msra.mxu0 0.0
    %638 = vmatprep.subr.mxu0 0.0
    %639 = vmatpush1.xpose.msra.mxu0 0.0
    %640 = vmatprep.subr.mxu0 0.0
    %641 = vmatpush1.xpose.msra.mxu0 0.0
    %642 = vmatprep.subr.mxu0 0.0
    %643 = vmatpush1.xpose.msra.mxu0 0.0
    %644 = vmatprep.subr.mxu0 0.0
    %645 = vmatpush1.xpose.msra.mxu0 0.0
    %646 = vmatprep.subr.mxu0 0.0
    %647 = vmatpush1.xpose.msra.mxu0 0.0
    %648 = vmatprep.subr.mxu0 0.0
    %649 = vmatpush1.xpose.msra.mxu0 0.0
    %650 = vmatprep.subr.mxu0 0.0
    %651 = vmatpush1.xpose.msra.mxu0 0.0
    %652 = vmatprep.mubr.f32.mxu0 0.0
    %653 = vmatmul.mubr.f32.gmra.mrb[0].mxu0 %v584
    %v654 = vpop.f32.mrb[0].mxu0
    %v655 = vadd.f32 0.0, %v654
    %v656 = vpop.f32.mrb[0].mxu0
    %657 = vdwg.mxu0
    %658 = vrot.lane.b32.xlu0 %v198, 96
    %v659 = vpop.permute.xlu0 %658
    %v660 = vsel %vm203, %v198, 0
    %v662 = vsel %vm203, %v659, 0
    %664 = vmatprep.subr.mxu0 0.0
    %665 = vmatpush1.xpose.msra.mxu0 %v662
    %666 = vmatprep.subr.mxu0 0.0
    %667 = vmatpush1.xpose.msra.mxu0 0.0
    %668 = vmatprep.subr.mxu0 0.0
    %669 = vmatpush1.xpose.msra.mxu0 0.0
    %670 = vmatprep.subr.mxu0 0.0
    %671 = vmatpush1.xpose.msra.mxu0 0.0
    %672 = vmatprep.subr.mxu0 0.0
    %673 = vmatpush1.xpose.msra.mxu0 0.0
    %674 = vmatprep.subr.mxu0 0.0
    %675 = vmatpush1.xpose.msra.mxu0 0.0
    %676 = vmatprep.subr.mxu0 0.0
    %677 = vmatpush1.xpose.msra.mxu0 0.0
    %678 = vmatprep.subr.mxu0 0.0
    %679 = vmatpush1.xpose.msra.mxu0 0.0
    %680 = vmatprep.subr.mxu0 0.0
    %681 = vmatpush1.xpose.msra.mxu0 0.0
    %682 = vmatprep.subr.mxu0 0.0
    %683 = vmatpush1.xpose.msra.mxu0 0.0
    %684 = vmatprep.subr.mxu0 0.0
    %685 = vmatpush1.xpose.msra.mxu0 0.0
    %686 = vmatprep.subr.mxu0 0.0
    %687 = vmatpush1.xpose.msra.mxu0 0.0
    %688 = vmatprep.subr.mxu0 0.0
    %689 = vmatpush1.xpose.msra.mxu0 0.0
    %690 = vmatprep.subr.mxu0 0.0
    %691 = vmatpush1.xpose.msra.mxu0 0.0
    %692 = vmatprep.subr.mxu0 0.0
    %693 = vmatpush1.xpose.msra.mxu0 0.0
    %694 = vmatprep.subr.mxu0 0.0
    %695 = vmatpush1.xpose.msra.mxu0 0.0
    %696 = vmatprep.subr.mxu0 0.0
    %697 = vmatpush1.xpose.msra.mxu0 0.0
    %698 = vmatprep.subr.mxu0 0.0
    %699 = vmatpush1.xpose.msra.mxu0 0.0
    %700 = vmatprep.subr.mxu0 0.0
    %701 = vmatpush1.xpose.msra.mxu0 0.0
    %702 = vmatprep.subr.mxu0 0.0
    %703 = vmatpush1.xpose.msra.mxu0 0.0
    %704 = vmatprep.subr.mxu0 0.0
    %705 = vmatpush1.xpose.msra.mxu0 0.0
    %706 = vmatprep.subr.mxu0 0.0
    %707 = vmatpush1.xpose.msra.mxu0 0.0
    %708 = vmatprep.subr.mxu0 0.0
    %709 = vmatpush1.xpose.msra.mxu0 0.0
    %710 = vmatprep.subr.mxu0 0.0
    %711 = vmatpush1.xpose.msra.mxu0 0.0
    %712 = vmatprep.subr.mxu0 0.0
    %713 = vmatpush1.xpose.msra.mxu0 0.0
    %714 = vmatprep.subr.mxu0 0.0
    %715 = vmatpush1.xpose.msra.mxu0 0.0
    %716 = vmatprep.subr.mxu0 0.0
    %717 = vmatpush1.xpose.msra.mxu0 0.0
    %718 = vmatprep.subr.mxu0 0.0
    %719 = vmatpush1.xpose.msra.mxu0 0.0
    %720 = vmatprep.subr.mxu0 0.0
    %721 = vmatpush1.xpose.msra.mxu0 0.0
    %722 = vmatprep.subr.mxu0 0.0
    %723 = vmatpush1.xpose.msra.mxu0 0.0
    %724 = vmatprep.subr.mxu0 0.0
    %725 = vmatpush1.xpose.msra.mxu0 0.0
    %726 = vmatprep.subr.mxu0 0.0
    %727 = vmatpush1.xpose.msra.mxu0 0.0
    %728 = vmatprep.mubr.f32.mxu0 0.0
    %729 = vmatmul.mubr.f32.gmra.mrb[0].mxu0 %v660
    %v730 = vpop.f32.mrb[0].mxu0
    %v731 = vadd.f32 0.0, %v730
    %v732 = vpop.f32.mrb[0].mxu0
    %733 = vdwg.mxu0
    %734 = vrot.lane.b32.xlu0 %v200, 96
    %v735 = vpop.permute.xlu0 %734
    %v736 = vsel %vm203, %v200, 0
    %v738 = vsel %vm203, %v735, 0
    %740 = vmatprep.subr.mxu0 0.0
    %741 = vmatpush1.xpose.msra.mxu0 %v738
    %742 = vmatprep.subr.mxu0 0.0
    %743 = vmatpush1.xpose.msra.mxu0 0.0
    %744 = vmatprep.subr.mxu0 0.0
    %745 = vmatpush1.xpose.msra.mxu0 0.0
    %746 = vmatprep.subr.mxu0 0.0
    %747 = vmatpush1.xpose.msra.mxu0 0.0
    %748 = vmatprep.subr.mxu0 0.0
    %749 = vmatpush1.xpose.msra.mxu0 0.0
    %750 = vmatprep.subr.mxu0 0.0
    %751 = vmatpush1.xpose.msra.mxu0 0.0
    %752 = vmatprep.subr.mxu0 0.0
    %753 = vmatpush1.xpose.msra.mxu0 0.0
    %754 = vmatprep.subr.mxu0 0.0
    %755 = vmatpush1.xpose.msra.mxu0 0.0
    %756 = vmatprep.subr.mxu0 0.0
    %757 = vmatpush1.xpose.msra.mxu0 0.0
    %758 = vmatprep.subr.mxu0 0.0
    %759 = vmatpush1.xpose.msra.mxu0 0.0
    %760 = vmatprep.subr.mxu0 0.0
    %761 = vmatpush1.xpose.msra.mxu0 0.0
    %762 = vmatprep.subr.mxu0 0.0
    %763 = vmatpush1.xpose.msra.mxu0 0.0
    %764 = vmatprep.subr.mxu0 0.0
    %765 = vmatpush1.xpose.msra.mxu0 0.0
    %766 = vmatprep.subr.mxu0 0.0
    %767 = vmatpush1.xpose.msra.mxu0 0.0
    %768 = vmatprep.subr.mxu0 0.0
    %769 = vmatpush1.xpose.msra.mxu0 0.0
    %770 = vmatprep.subr.mxu0 0.0
    %771 = vmatpush1.xpose.msra.mxu0 0.0
    %772 = vmatprep.subr.mxu0 0.0
    %773 = vmatpush1.xpose.msra.mxu0 0.0
    %774 = vmatprep.subr.mxu0 0.0
    %775 = vmatpush1.xpose.msra.mxu0 0.0
    %776 = vmatprep.subr.mxu0 0.0
    %777 = vmatpush1.xpose.msra.mxu0 0.0
    %778 = vmatprep.subr.mxu0 0.0
    %779 = vmatpush1.xpose.msra.mxu0 0.0
    %780 = vmatprep.subr.mxu0 0.0
    %781 = vmatpush1.xpose.msra.mxu0 0.0
    %782 = vmatprep.subr.mxu0 0.0
    %783 = vmatpush1.xpose.msra.mxu0 0.0
    %784 = vmatprep.subr.mxu0 0.0
    %785 = vmatpush1.xpose.msra.mxu0 0.0
    %786 = vmatprep.subr.mxu0 0.0
    %787 = vmatpush1.xpose.msra.mxu0 0.0
    %788 = vmatprep.subr.mxu0 0.0
    %789 = vmatpush1.xpose.msra.mxu0 0.0
    %790 = vmatprep.subr.mxu0 0.0
    %791 = vmatpush1.xpose.msra.mxu0 0.0
    %792 = vmatprep.subr.mxu0 0.0
    %793 = vmatpush1.xpose.msra.mxu0 0.0
    %794 = vmatprep.subr.mxu0 0.0
    %795 = vmatpush1.xpose.msra.mxu0 0.0
    %796 = vmatprep.subr.mxu0 0.0
    %797 = vmatpush1.xpose.msra.mxu0 0.0
    %798 = vmatprep.subr.mxu0 0.0
    %799 = vmatpush1.xpose.msra.mxu0 0.0
    %800 = vmatprep.subr.mxu0 0.0
    %801 = vmatpush1.xpose.msra.mxu0 0.0
    %802 = vmatprep.subr.mxu0 0.0
    %803 = vmatpush1.xpose.msra.mxu0 0.0
    %804 = vmatprep.mubr.f32.mxu0 0.0
    %805 = vmatmul.mubr.f32.gmra.mrb[0].mxu0 %v736
    %v806 = vpop.f32.mrb[0].mxu0
    %v807 = vadd.f32 0.0, %v806
    %v808 = vpop.f32.mrb[0].mxu0
    %809 = vdwg.mxu0
    %v810 = vmul.f32 %v275, 0.35355338
    %v811 = vmul.f32 %v351, 0.35355338
    %v812 = vmul.f32 %v427, 0.35355338
    %v813 = vmul.f32 %v503, 0.35355338
    %v814 = vmul.f32 %v579, 0.35355338
    %v815 = vmul.f32 %v655, 0.35355338
    %v816 = vmul.f32 %v731, 0.35355338
    %v817 = vmul.f32 %v807, 0.35355338
    %v818 = vsel %vm42, 1, 0
    %vm819 = vcmp.eq.s32.totalorder %v818, 1
    %v820 = vsel %vm819, %v810, -1e+30
    %v821 = vsel %vm819, %v811, -1e+30
    %v822 = vsel %vm819, %v812, -1e+30
    %v823 = vsel %vm819, %v813, -1e+30
    %v824 = vsel %vm819, %v814, -1e+30
    %v825 = vsel %vm819, %v815, -1e+30
    %v826 = vsel %vm819, %v816, -1e+30
    %v827 = vsel %vm819, %v817, -1e+30
    %v828 = vsel %vm203, %v820, -inf
    %829 = vmax.xlane.f32.xlu0 %v828
    %v830 = vpop.xlane.xlu0 %829
    %v831 = vsel %vm203, %v821, -inf
    %832 = vmax.xlane.f32.xlu0 %v831
    %v833 = vpop.xlane.xlu0 %832
    %v834 = vsel %vm203, %v822, -inf
    %835 = vmax.xlane.f32.xlu0 %v834
    %v836 = vpop.xlane.xlu0 %835
    %v837 = vsel %vm203, %v823, -inf
    %838 = vmax.xlane.f32.xlu0 %v837
    %v839 = vpop.xlane.xlu0 %838
    %v840 = vsel %vm203, %v824, -inf
    %841 = vmax.xlane.f32.xlu0 %v840
    %v842 = vpop.xlane.xlu0 %841
    %v843 = vsel %vm203, %v825, -inf
    %844 = vmax.xlane.f32.xlu0 %v843
    %v845 = vpop.xlane.xlu0 %844
    %v846 = vsel %vm203, %v826, -inf
    %847 = vmax.xlane.f32.xlu0 %v846
    %v848 = vpop.xlane.xlu0 %847
    %v849 = vsel %vm203, %v827, -inf
    %850 = vmax.xlane.f32.xlu0 %v849
    %v851 = vpop.xlane.xlu0 %850
    %v852 = vsub.f32 %v820, %v830
    %v853 = vsub.f32 %v821, %v833
    %v854 = vsub.f32 %v822, %v836
    %v855 = vsub.f32 %v823, %v839
    %v856 = vsub.f32 %v824, %v842
    %v857 = vsub.f32 %v825, %v845
    %v858 = vsub.f32 %v826, %v848
    %v859 = vsub.f32 %v827, %v851
    %v860 = vmul.f32 %v852, 1.442695
    %v861 = vpow.pop %v860
    %v862 = vmul.f32 %v853, 1.442695
    %v863 = vpow.pop %v862
    %v864 = vmul.f32 %v854, 1.442695
    %v865 = vpow.pop %v864
    %v866 = vmul.f32 %v855, 1.442695
    %v867 = vpow.pop %v866
    %v868 = vmul.f32 %v856, 1.442695
    %v869 = vpow.pop %v868
    %v870 = vmul.f32 %v857, 1.442695
    %v871 = vpow.pop %v870
    %v872 = vmul.f32 %v858, 1.442695
    %v873 = vpow.pop %v872
    %v874 = vmul.f32 %v859, 1.442695
    %v875 = vpow.pop %v874
    %v876 = vsel %vm203, %v861, 0.0
    %877 = vadd.xlane.f32.xlu0 %v876
    %v878 = vpop.xlane.xlu0 %877
    %v879 = vsel %vm203, %v863, 0.0
    %880 = vadd.xlane.f32.xlu0 %v879
    %v881 = vpop.xlane.xlu0 %880
    %v882 = vsel %vm203, %v865, 0.0
    %883 = vadd.xlane.f32.xlu0 %v882
    %v884 = vpop.xlane.xlu0 %883
    %v885 = vsel %vm203, %v867, 0.0
    %886 = vadd.xlane.f32.xlu0 %v885
    %v887 = vpop.xlane.xlu0 %886
    %v888 = vsel %vm203, %v869, 0.0
    %889 = vadd.xlane.f32.xlu0 %v888
    %v890 = vpop.xlane.xlu0 %889
    %v891 = vsel %vm203, %v871, 0.0
    %892 = vadd.xlane.f32.xlu0 %v891
    %v893 = vpop.xlane.xlu0 %892
    %v894 = vsel %vm203, %v873, 0.0
    %895 = vadd.xlane.f32.xlu0 %v894
    %v896 = vpop.xlane.xlu0 %895
    %v897 = vsel %vm203, %v875, 0.0
    %898 = vadd.xlane.f32.xlu0 %v897
    %v899 = vpop.xlane.xlu0 %898
    %v900 = vrcp.pop %v878
    %v901 = vrcp.pop %v881
    %v902 = vrcp.pop %v884
    %v903 = vrcp.pop %v887
    %v904 = vrcp.pop %v890
    %v905 = vrcp.pop %v893
    %v906 = vrcp.pop %v896
    %v907 = vrcp.pop %v899
    %v908 = vmul.f32 %v861, %v900
    %v909 = vmul.f32 %v863, %v901
    %v910 = vmul.f32 %v865, %v902
    %v911 = vmul.f32 %v867, %v903
    %v912 = vmul.f32 %v869, %v904
    %v913 = vmul.f32 %v871, %v905
    %v914 = vmul.f32 %v873, %v906
    %v915 = vmul.f32 %v875, %v907
    %916 = vrot.lane.b32.xlu0 %v179, 64
    %v917 = vpop.permute.xlu0 %916
    %v920 = vsel %vm203, %v908, 0
    %922 = vmatprep.subr.mxu0 0.0
    %923 = vmatpush1.msra.mxu0 %v917
    %924 = vmatprep.subr.mxu0 0.0
    %925 = vmatpush1.msra.mxu0 0.0
    %926 = vmatprep.subr.mxu0 0.0
    %927 = vmatpush1.msra.mxu0 0.0
    %928 = vmatprep.subr.mxu0 0.0
    %929 = vmatpush1.msra.mxu0 0.0
    %930 = vmatprep.subr.mxu0 0.0
    %931 = vmatpush1.msra.mxu0 0.0
    %932 = vmatprep.subr.mxu0 0.0
    %933 = vmatpush1.msra.mxu0 0.0
    %934 = vmatprep.subr.mxu0 0.0
    %935 = vmatpush1.msra.mxu0 0.0
    %936 = vmatprep.subr.mxu0 0.0
    %937 = vmatpush1.msra.mxu0 0.0
    %938 = vmatprep.subr.mxu0 0.0
    %939 = vmatpush1.msra.mxu0 0.0
    %940 = vmatprep.subr.mxu0 0.0
    %941 = vmatpush1.msra.mxu0 0.0
    %942 = vmatprep.subr.mxu0 0.0
    %943 = vmatpush1.msra.mxu0 0.0
    %944 = vmatprep.subr.mxu0 0.0
    %945 = vmatpush1.msra.mxu0 0.0
    %946 = vmatprep.subr.mxu0 0.0
    %947 = vmatpush1.msra.mxu0 0.0
    %948 = vmatprep.subr.mxu0 0.0
    %949 = vmatpush1.msra.mxu0 0.0
    %950 = vmatprep.subr.mxu0 0.0
    %951 = vmatpush1.msra.mxu0 0.0
    %952 = vmatprep.subr.mxu0 0.0
    %953 = vmatpush1.msra.mxu0 0.0
    %954 = vmatprep.subr.mxu0 0.0
    %955 = vmatpush1.msra.mxu0 0.0
    %956 = vmatprep.subr.mxu0 0.0
    %957 = vmatpush1.msra.mxu0 0.0
    %958 = vmatprep.subr.mxu0 0.0
    %959 = vmatpush1.msra.mxu0 0.0
    %960 = vmatprep.subr.mxu0 0.0
    %961 = vmatpush1.msra.mxu0 0.0
    %962 = vmatprep.subr.mxu0 0.0
    %963 = vmatpush1.msra.mxu0 0.0
    %964 = vmatprep.subr.mxu0 0.0
    %965 = vmatpush1.msra.mxu0 0.0
    %966 = vmatprep.subr.mxu0 0.0
    %967 = vmatpush1.msra.mxu0 0.0
    %968 = vmatprep.subr.mxu0 0.0
    %969 = vmatpush1.msra.mxu0 0.0
    %970 = vmatprep.subr.mxu0 0.0
    %971 = vmatpush1.msra.mxu0 0.0
    %972 = vmatprep.subr.mxu0 0.0
    %973 = vmatpush1.msra.mxu0 0.0
    %974 = vmatprep.subr.mxu0 0.0
    %975 = vmatpush1.msra.mxu0 0.0
    %976 = vmatprep.subr.mxu0 0.0
    %977 = vmatpush1.msra.mxu0 0.0
    %978 = vmatprep.subr.mxu0 0.0
    %979 = vmatpush1.msra.mxu0 0.0
    %980 = vmatprep.subr.mxu0 0.0
    %981 = vmatpush1.msra.mxu0 0.0
    %982 = vmatprep.subr.mxu0 0.0
    %983 = vmatpush1.msra.mxu0 0.0
    %984 = vmatprep.subr.mxu0 0.0
    %985 = vmatpush1.msra.mxu0 0.0
    %986 = vmatprep.mubr.f32.mxu0 0.0
    %987 = vmatmul.mubr.f32.gmra.mrb[0].mxu0 %v920
    %v988 = vpop.f32.mrb[0].mxu0
    %v989 = vadd.f32 0.0, %v988
    %v990 = vpop.f32.mrb[0].mxu0
    %991 = vdwg.mxu0
    %992 = vrot.lane.b32.xlu0 %v184, 64
    %v993 = vpop.permute.xlu0 %992
    %v996 = vsel %vm203, %v909, 0
    %998 = vmatprep.subr.mxu0 0.0
    %999 = vmatpush1.msra.mxu0 %v993
    %1000 = vmatprep.subr.mxu0 0.0
    %1001 = vmatpush1.msra.mxu0 0.0
    %1002 = vmatprep.subr.mxu0 0.0
    %1003 = vmatpush1.msra.mxu0 0.0
    %1004 = vmatprep.subr.mxu0 0.0
    %1005 = vmatpush1.msra.mxu0 0.0
    %1006 = vmatprep.subr.mxu0 0.0
    %1007 = vmatpush1.msra.mxu0 0.0
    %1008 = vmatprep.subr.mxu0 0.0
    %1009 = vmatpush1.msra.mxu0 0.0
    %1010 = vmatprep.subr.mxu0 0.0
    %1011 = vmatpush1.msra.mxu0 0.0
    %1012 = vmatprep.subr.mxu0 0.0
    %1013 = vmatpush1.msra.mxu0 0.0
    %1014 = vmatprep.subr.mxu0 0.0
    %1015 = vmatpush1.msra.mxu0 0.0
    %1016 = vmatprep.subr.mxu0 0.0
    %1017 = vmatpush1.msra.mxu0 0.0
    %1018 = vmatprep.subr.mxu0 0.0
    %1019 = vmatpush1.msra.mxu0 0.0
    %1020 = vmatprep.subr.mxu0 0.0
    %1021 = vmatpush1.msra.mxu0 0.0
    %1022 = vmatprep.subr.mxu0 0.0
    %1023 = vmatpush1.msra.mxu0 0.0
    %1024 = vmatprep.subr.mxu0 0.0
    %1025 = vmatpush1.msra.mxu0 0.0
    %1026 = vmatprep.subr.mxu0 0.0
    %1027 = vmatpush1.msra.mxu0 0.0
    %1028 = vmatprep.subr.mxu0 0.0
    %1029 = vmatpush1.msra.mxu0 0.0
    %1030 = vmatprep.subr.mxu0 0.0
    %1031 = vmatpush1.msra.mxu0 0.0
    %1032 = vmatprep.subr.mxu0 0.0
    %1033 = vmatpush1.msra.mxu0 0.0
    %1034 = vmatprep.subr.mxu0 0.0
    %1035 = vmatpush1.msra.mxu0 0.0
    %1036 = vmatprep.subr.mxu0 0.0
    %1037 = vmatpush1.msra.mxu0 0.0
    %1038 = vmatprep.subr.mxu0 0.0
    %1039 = vmatpush1.msra.mxu0 0.0
    %1040 = vmatprep.subr.mxu0 0.0
    %1041 = vmatpush1.msra.mxu0 0.0
    %1042 = vmatprep.subr.mxu0 0.0
    %1043 = vmatpush1.msra.mxu0 0.0
    %1044 = vmatprep.subr.mxu0 0.0
    %1045 = vmatpush1.msra.mxu0 0.0
    %1046 = vmatprep.subr.mxu0 0.0
    %1047 = vmatpush1.msra.mxu0 0.0
    %1048 = vmatprep.subr.mxu0 0.0
    %1049 = vmatpush1.msra.mxu0 0.0
    %1050 = vmatprep.subr.mxu0 0.0
    %1051 = vmatpush1.msra.mxu0 0.0
    %1052 = vmatprep.subr.mxu0 0.0
    %1053 = vmatpush1.msra.mxu0 0.0
    %1054 = vmatprep.subr.mxu0 0.0
    %1055 = vmatpush1.msra.mxu0 0.0
    %1056 = vmatprep.subr.mxu0 0.0
    %1057 = vmatpush1.msra.mxu0 0.0
    %1058 = vmatprep.subr.mxu0 0.0
    %1059 = vmatpush1.msra.mxu0 0.0
    %1060 = vmatprep.subr.mxu0 0.0
    %1061 = vmatpush1.msra.mxu0 0.0
    %1062 = vmatprep.mubr.f32.mxu0 0.0
    %1063 = vmatmul.mubr.f32.gmra.mrb[0].mxu0 %v996
    %v1064 = vpop.f32.mrb[0].mxu0
    %v1065 = vadd.f32 0.0, %v1064
    %v1066 = vpop.f32.mrb[0].mxu0
    %1067 = vdwg.mxu0
    %1068 = vrot.lane.b32.xlu0 %v190, 64
    %v1069 = vpop.permute.xlu0 %1068
    %v1072 = vsel %vm203, %v910, 0
    %1074 = vmatprep.subr.mxu0 0.0
    %1075 = vmatpush1.msra.mxu0 %v1069
    %1076 = vmatprep.subr.mxu0 0.0
    %1077 = vmatpush1.msra.mxu0 0.0
    %1078 = vmatprep.subr.mxu0 0.0
    %1079 = vmatpush1.msra.mxu0 0.0
    %1080 = vmatprep.subr.mxu0 0.0
    %1081 = vmatpush1.msra.mxu0 0.0
    %1082 = vmatprep.subr.mxu0 0.0
    %1083 = vmatpush1.msra.mxu0 0.0
    %1084 = vmatprep.subr.mxu0 0.0
    %1085 = vmatpush1.msra.mxu0 0.0
    %1086 = vmatprep.subr.mxu0 0.0
    %1087 = vmatpush1.msra.mxu0 0.0
    %1088 = vmatprep.subr.mxu0 0.0
    %1089 = vmatpush1.msra.mxu0 0.0
    %1090 = vmatprep.subr.mxu0 0.0
    %1091 = vmatpush1.msra.mxu0 0.0
    %1092 = vmatprep.subr.mxu0 0.0
    %1093 = vmatpush1.msra.mxu0 0.0
    %1094 = vmatprep.subr.mxu0 0.0
    %1095 = vmatpush1.msra.mxu0 0.0
    %1096 = vmatprep.subr.mxu0 0.0
    %1097 = vmatpush1.msra.mxu0 0.0
    %1098 = vmatprep.subr.mxu0 0.0
    %1099 = vmatpush1.msra.mxu0 0.0
    %1100 = vmatprep.subr.mxu0 0.0
    %1101 = vmatpush1.msra.mxu0 0.0
    %1102 = vmatprep.subr.mxu0 0.0
    %1103 = vmatpush1.msra.mxu0 0.0
    %1104 = vmatprep.subr.mxu0 0.0
    %1105 = vmatpush1.msra.mxu0 0.0
    %1106 = vmatprep.subr.mxu0 0.0
    %1107 = vmatpush1.msra.mxu0 0.0
    %1108 = vmatprep.subr.mxu0 0.0
    %1109 = vmatpush1.msra.mxu0 0.0
    %1110 = vmatprep.subr.mxu0 0.0
    %1111 = vmatpush1.msra.mxu0 0.0
    %1112 = vmatprep.subr.mxu0 0.0
    %1113 = vmatpush1.msra.mxu0 0.0
    %1114 = vmatprep.subr.mxu0 0.0
    %1115 = vmatpush1.msra.mxu0 0.0
    %1116 = vmatprep.subr.mxu0 0.0
    %1117 = vmatpush1.msra.mxu0 0.0
    %1118 = vmatprep.subr.mxu0 0.0
    %1119 = vmatpush1.msra.mxu0 0.0
    %1120 = vmatprep.subr.mxu0 0.0
    %1121 = vmatpush1.msra.mxu0 0.0
    %1122 = vmatprep.subr.mxu0 0.0
    %1123 = vmatpush1.msra.mxu0 0.0
    %1124 = vmatprep.subr.mxu0 0.0
    %1125 = vmatpush1.msra.mxu0 0.0
    %1126 = vmatprep.subr.mxu0 0.0
    %1127 = vmatpush1.msra.mxu0 0.0
    %1128 = vmatprep.subr.mxu0 0.0
    %1129 = vmatpush1.msra.mxu0 0.0
    %1130 = vmatprep.subr.mxu0 0.0
    %1131 = vmatpush1.msra.mxu0 0.0
    %1132 = vmatprep.subr.mxu0 0.0
    %1133 = vmatpush1.msra.mxu0 0.0
    %1134 = vmatprep.subr.mxu0 0.0
    %1135 = vmatpush1.msra.mxu0 0.0
    %1136 = vmatprep.subr.mxu0 0.0
    %1137 = vmatpush1.msra.mxu0 0.0
    %1138 = vmatprep.mubr.f32.mxu0 0.0
    %1139 = vmatmul.mubr.f32.gmra.mrb[0].mxu0 %v1072
    %v1140 = vpop.f32.mrb[0].mxu0
    %v1141 = vadd.f32 0.0, %v1140
    %v1142 = vpop.f32.mrb[0].mxu0
    %1143 = vdwg.mxu0
    %1144 = vrot.lane.b32.xlu0 %v192, 64
    %v1145 = vpop.permute.xlu0 %1144
    %v1148 = vsel %vm203, %v911, 0
    %1150 = vmatprep.subr.mxu0 0.0
    %1151 = vmatpush1.msra.mxu0 %v1145
    %1152 = vmatprep.subr.mxu0 0.0
    %1153 = vmatpush1.msra.mxu0 0.0
    %1154 = vmatprep.subr.mxu0 0.0
    %1155 = vmatpush1.msra.mxu0 0.0
    %1156 = vmatprep.subr.mxu0 0.0
    %1157 = vmatpush1.msra.mxu0 0.0
    %1158 = vmatprep.subr.mxu0 0.0
    %1159 = vmatpush1.msra.mxu0 0.0
    %1160 = vmatprep.subr.mxu0 0.0
    %1161 = vmatpush1.msra.mxu0 0.0
    %1162 = vmatprep.subr.mxu0 0.0
    %1163 = vmatpush1.msra.mxu0 0.0
    %1164 = vmatprep.subr.mxu0 0.0
    %1165 = vmatpush1.msra.mxu0 0.0
    %1166 = vmatprep.subr.mxu0 0.0
    %1167 = vmatpush1.msra.mxu0 0.0
    %1168 = vmatprep.subr.mxu0 0.0
    %1169 = vmatpush1.msra.mxu0 0.0
    %1170 = vmatprep.subr.mxu0 0.0
    %1171 = vmatpush1.msra.mxu0 0.0
    %1172 = vmatprep.subr.mxu0 0.0
    %1173 = vmatpush1.msra.mxu0 0.0
    %1174 = vmatprep.subr.mxu0 0.0
    %1175 = vmatpush1.msra.mxu0 0.0
    %1176 = vmatprep.subr.mxu0 0.0
    %1177 = vmatpush1.msra.mxu0 0.0
    %1178 = vmatprep.subr.mxu0 0.0
    %1179 = vmatpush1.msra.mxu0 0.0
    %1180 = vmatprep.subr.mxu0 0.0
    %1181 = vmatpush1.msra.mxu0 0.0
    %1182 = vmatprep.subr.mxu0 0.0
    %1183 = vmatpush1.msra.mxu0 0.0
    %1184 = vmatprep.subr.mxu0 0.0
    %1185 = vmatpush1.msra.mxu0 0.0
    %1186 = vmatprep.subr.mxu0 0.0
    %1187 = vmatpush1.msra.mxu0 0.0
    %1188 = vmatprep.subr.mxu0 0.0
    %1189 = vmatpush1.msra.mxu0 0.0
    %1190 = vmatprep.subr.mxu0 0.0
    %1191 = vmatpush1.msra.mxu0 0.0
    %1192 = vmatprep.subr.mxu0 0.0
    %1193 = vmatpush1.msra.mxu0 0.0
    %1194 = vmatprep.subr.mxu0 0.0
    %1195 = vmatpush1.msra.mxu0 0.0
    %1196 = vmatprep.subr.mxu0 0.0
    %1197 = vmatpush1.msra.mxu0 0.0
    %1198 = vmatprep.subr.mxu0 0.0
    %1199 = vmatpush1.msra.mxu0 0.0
    %1200 = vmatprep.subr.mxu0 0.0
    %1201 = vmatpush1.msra.mxu0 0.0
    %1202 = vmatprep.subr.mxu0 0.0
    %1203 = vmatpush1.msra.mxu0 0.0
    %1204 = vmatprep.subr.mxu0 0.0
    %1205 = vmatpush1.msra.mxu0 0.0
    %1206 = vmatprep.subr.mxu0 0.0
    %1207 = vmatpush1.msra.mxu0 0.0
    %1208 = vmatprep.subr.mxu0 0.0
    %1209 = vmatpush1.msra.mxu0 0.0
    %1210 = vmatprep.subr.mxu0 0.0
    %1211 = vmatpush1.msra.mxu0 0.0
    %1212 = vmatprep.subr.mxu0 0.0
    %1213 = vmatpush1.msra.mxu0 0.0
    %1214 = vmatprep.mubr.f32.mxu0 0.0
    %1215 = vmatmul.mubr.f32.gmra.mrb[0].mxu0 %v1148
    %v1216 = vpop.f32.mrb[0].mxu0
    %v1217 = vadd.f32 0.0, %v1216
    %v1218 = vpop.f32.mrb[0].mxu0
    %1219 = vdwg.mxu0
    %1220 = vrot.lane.b32.xlu0 %v194, 64
    %v1221 = vpop.permute.xlu0 %1220
    %v1224 = vsel %vm203, %v912, 0
    %1226 = vmatprep.subr.mxu0 0.0
    %1227 = vmatpush1.msra.mxu0 %v1221
    %1228 = vmatprep.subr.mxu0 0.0
    %1229 = vmatpush1.msra.mxu0 0.0
    %1230 = vmatprep.subr.mxu0 0.0
    %1231 = vmatpush1.msra.mxu0 0.0
    %1232 = vmatprep.subr.mxu0 0.0
    %1233 = vmatpush1.msra.mxu0 0.0
    %1234 = vmatprep.subr.mxu0 0.0
    %1235 = vmatpush1.msra.mxu0 0.0
    %1236 = vmatprep.subr.mxu0 0.0
    %1237 = vmatpush1.msra.mxu0 0.0
    %1238 = vmatprep.subr.mxu0 0.0
    %1239 = vmatpush1.msra.mxu0 0.0
    %1240 = vmatprep.subr.mxu0 0.0
    %1241 = vmatpush1.msra.mxu0 0.0
    %1242 = vmatprep.subr.mxu0 0.0
    %1243 = vmatpush1.msra.mxu0 0.0
    %1244 = vmatprep.subr.mxu0 0.0
    %1245 = vmatpush1.msra.mxu0 0.0
    %1246 = vmatprep.subr.mxu0 0.0
    %1247 = vmatpush1.msra.mxu0 0.0
    %1248 = vmatprep.subr.mxu0 0.0
    %1249 = vmatpush1.msra.mxu0 0.0
    %1250 = vmatprep.subr.mxu0 0.0
    %1251 = vmatpush1.msra.mxu0 0.0
    %1252 = vmatprep.subr.mxu0 0.0
    %1253 = vmatpush1.msra.mxu0 0.0
    %1254 = vmatprep.subr.mxu0 0.0
    %1255 = vmatpush1.msra.mxu0 0.0
    %1256 = vmatprep.subr.mxu0 0.0
    %1257 = vmatpush1.msra.mxu0 0.0
    %1258 = vmatprep.subr.mxu0 0.0
    %1259 = vmatpush1.msra.mxu0 0.0
    %1260 = vmatprep.subr.mxu0 0.0
    %1261 = vmatpush1.msra.mxu0 0.0
    %1262 = vmatprep.subr.mxu0 0.0
    %1263 = vmatpush1.msra.mxu0 0.0
    %1264 = vmatprep.subr.mxu0 0.0
    %1265 = vmatpush1.msra.mxu0 0.0
    %1266 = vmatprep.subr.mxu0 0.0
    %1267 = vmatpush1.msra.mxu0 0.0
    %1268 = vmatprep.subr.mxu0 0.0
    %1269 = vmatpush1.msra.mxu0 0.0
    %1270 = vmatprep.subr.mxu0 0.0
    %1271 = vmatpush1.msra.mxu0 0.0
    %1272 = vmatprep.subr.mxu0 0.0
    %1273 = vmatpush1.msra.mxu0 0.0
    %1274 = vmatprep.subr.mxu0 0.0
    %1275 = vmatpush1.msra.mxu0 0.0
    %1276 = vmatprep.subr.mxu0 0.0
    %1277 = vmatpush1.msra.mxu0 0.0
    %1278 = vmatprep.subr.mxu0 0.0
    %1279 = vmatpush1.msra.mxu0 0.0
    %1280 = vmatprep.subr.mxu0 0.0
    %1281 = vmatpush1.msra.mxu0 0.0
    %1282 = vmatprep.subr.mxu0 0.0
    %1283 = vmatpush1.msra.mxu0 0.0
    %1284 = vmatprep.subr.mxu0 0.0
    %1285 = vmatpush1.msra.mxu0 0.0
    %1286 = vmatprep.subr.mxu0 0.0
    %1287 = vmatpush1.msra.mxu0 0.0
    %1288 = vmatprep.subr.mxu0 0.0
    %1289 = vmatpush1.msra.mxu0 0.0
    %1290 = vmatprep.mubr.f32.mxu0 0.0
    %1291 = vmatmul.mubr.f32.gmra.mrb[0].mxu0 %v1224
    %v1292 = vpop.f32.mrb[0].mxu0
    %v1293 = vadd.f32 0.0, %v1292
    %v1294 = vpop.f32.mrb[0].mxu0
    %1295 = vdwg.mxu0
    %1296 = vrot.lane.b32.xlu0 %v196, 64
    %v1297 = vpop.permute.xlu0 %1296
    %v1300 = vsel %vm203, %v913, 0
    %1302 = vmatprep.subr.mxu0 0.0
    %1303 = vmatpush1.msra.mxu0 %v1297
    %1304 = vmatprep.subr.mxu0 0.0
    %1305 = vmatpush1.msra.mxu0 0.0
    %1306 = vmatprep.subr.mxu0 0.0
    %1307 = vmatpush1.msra.mxu0 0.0
    %1308 = vmatprep.subr.mxu0 0.0
    %1309 = vmatpush1.msra.mxu0 0.0
    %1310 = vmatprep.subr.mxu0 0.0
    %1311 = vmatpush1.msra.mxu0 0.0
    %1312 = vmatprep.subr.mxu0 0.0
    %1313 = vmatpush1.msra.mxu0 0.0
    %1314 = vmatprep.subr.mxu0 0.0
    %1315 = vmatpush1.msra.mxu0 0.0
    %1316 = vmatprep.subr.mxu0 0.0
    %1317 = vmatpush1.msra.mxu0 0.0
    %1318 = vmatprep.subr.mxu0 0.0
    %1319 = vmatpush1.msra.mxu0 0.0
    %1320 = vmatprep.subr.mxu0 0.0
    %1321 = vmatpush1.msra.mxu0 0.0
    %1322 = vmatprep.subr.mxu0 0.0
    %1323 = vmatpush1.msra.mxu0 0.0
    %1324 = vmatprep.subr.mxu0 0.0
    %1325 = vmatpush1.msra.mxu0 0.0
    %1326 = vmatprep.subr.mxu0 0.0
    %1327 = vmatpush1.msra.mxu0 0.0
    %1328 = vmatprep.subr.mxu0 0.0
    %1329 = vmatpush1.msra.mxu0 0.0
    %1330 = vmatprep.subr.mxu0 0.0
    %1331 = vmatpush1.msra.mxu0 0.0
    %1332 = vmatprep.subr.mxu0 0.0
    %1333 = vmatpush1.msra.mxu0 0.0
    %1334 = vmatprep.subr.mxu0 0.0
    %1335 = vmatpush1.msra.mxu0 0.0
    %1336 = vmatprep.subr.mxu0 0.0
    %1337 = vmatpush1.msra.mxu0 0.0
    %1338 = vmatprep.subr.mxu0 0.0
    %1339 = vmatpush1.msra.mxu0 0.0
    %1340 = vmatprep.subr.mxu0 0.0
    %1341 = vmatpush1.msra.mxu0 0.0
    %1342 = vmatprep.subr.mxu0 0.0
    %1343 = vmatpush1.msra.mxu0 0.0
    %1344 = vmatprep.subr.mxu0 0.0
    %1345 = vmatpush1.msra.mxu0 0.0
    %1346 = vmatprep.subr.mxu0 0.0
    %1347 = vmatpush1.msra.mxu0 0.0
    %1348 = vmatprep.subr.mxu0 0.0
    %1349 = vmatpush1.msra.mxu0 0.0
    %1350 = vmatprep.subr.mxu0 0.0
    %1351 = vmatpush1.msra.mxu0 0.0
    %1352 = vmatprep.subr.mxu0 0.0
    %1353 = vmatpush1.msra.mxu0 0.0
    %1354 = vmatprep.subr.mxu0 0.0
    %1355 = vmatpush1.msra.mxu0 0.0
    %1356 = vmatprep.subr.mxu0 0.0
    %1357 = vmatpush1.msra.mxu0 0.0
    %1358 = vmatprep.subr.mxu0 0.0
    %1359 = vmatpush1.msra.mxu0 0.0
    %1360 = vmatprep.subr.mxu0 0.0
    %1361 = vmatpush1.msra.mxu0 0.0
    %1362 = vmatprep.subr.mxu0 0.0
    %1363 = vmatpush1.msra.mxu0 0.0
    %1364 = vmatprep.subr.mxu0 0.0
    %1365 = vmatpush1.msra.mxu0 0.0
    %1366 = vmatprep.mubr.f32.mxu0 0.0
    %1367 = vmatmul.mubr.f32.gmra.mrb[0].mxu0 %v1300
    %v1368 = vpop.f32.mrb[0].mxu0
    %v1369 = vadd.f32 0.0, %v1368
    %v1370 = vpop.f32.mrb[0].mxu0
    %1371 = vdwg.mxu0
    %1372 = vrot.lane.b32.xlu0 %v198, 64
    %v1373 = vpop.permute.xlu0 %1372
    %v1376 = vsel %vm203, %v914, 0
    %1378 = vmatprep.subr.mxu0 0.0
    %1379 = vmatpush1.msra.mxu0 %v1373
    %1380 = vmatprep.subr.mxu0 0.0
    %1381 = vmatpush1.msra.mxu0 0.0
    %1382 = vmatprep.subr.mxu0 0.0
    %1383 = vmatpush1.msra.mxu0 0.0
    %1384 = vmatprep.subr.mxu0 0.0
    %1385 = vmatpush1.msra.mxu0 0.0
    %1386 = vmatprep.subr.mxu0 0.0
    %1387 = vmatpush1.msra.mxu0 0.0
    %1388 = vmatprep.subr.mxu0 0.0
    %1389 = vmatpush1.msra.mxu0 0.0
    %1390 = vmatprep.subr.mxu0 0.0
    %1391 = vmatpush1.msra.mxu0 0.0
    %1392 = vmatprep.subr.mxu0 0.0
    %1393 = vmatpush1.msra.mxu0 0.0
    %1394 = vmatprep.subr.mxu0 0.0
    %1395 = vmatpush1.msra.mxu0 0.0
    %1396 = vmatprep.subr.mxu0 0.0
    %1397 = vmatpush1.msra.mxu0 0.0
    %1398 = vmatprep.subr.mxu0 0.0
    %1399 = vmatpush1.msra.mxu0 0.0
    %1400 = vmatprep.subr.mxu0 0.0
    %1401 = vmatpush1.msra.mxu0 0.0
    %1402 = vmatprep.subr.mxu0 0.0
    %1403 = vmatpush1.msra.mxu0 0.0
    %1404 = vmatprep.subr.mxu0 0.0
    %1405 = vmatpush1.msra.mxu0 0.0
    %1406 = vmatprep.subr.mxu0 0.0
    %1407 = vmatpush1.msra.mxu0 0.0
    %1408 = vmatprep.subr.mxu0 0.0
    %1409 = vmatpush1.msra.mxu0 0.0
    %1410 = vmatprep.subr.mxu0 0.0
    %1411 = vmatpush1.msra.mxu0 0.0
    %1412 = vmatprep.subr.mxu0 0.0
    %1413 = vmatpush1.msra.mxu0 0.0
    %1414 = vmatprep.subr.mxu0 0.0
    %1415 = vmatpush1.msra.mxu0 0.0
    %1416 = vmatprep.subr.mxu0 0.0
    %1417 = vmatpush1.msra.mxu0 0.0
    %1418 = vmatprep.subr.mxu0 0.0
    %1419 = vmatpush1.msra.mxu0 0.0
    %1420 = vmatprep.subr.mxu0 0.0
    %1421 = vmatpush1.msra.mxu0 0.0
    %1422 = vmatprep.subr.mxu0 0.0
    %1423 = vmatpush1.msra.mxu0 0.0
    %1424 = vmatprep.subr.mxu0 0.0
    %1425 = vmatpush1.msra.mxu0 0.0
    %1426 = vmatprep.subr.mxu0 0.0
    %1427 = vmatpush1.msra.mxu0 0.0
    %1428 = vmatprep.subr.mxu0 0.0
    %1429 = vmatpush1.msra.mxu0 0.0
    %1430 = vmatprep.subr.mxu0 0.0
    %1431 = vmatpush1.msra.mxu0 0.0
    %1432 = vmatprep.subr.mxu0 0.0
    %1433 = vmatpush1.msra.mxu0 0.0
    %1434 = vmatprep.subr.mxu0 0.0
    %1435 = vmatpush1.msra.mxu0 0.0
    %1436 = vmatprep.subr.mxu0 0.0
    %1437 = vmatpush1.msra.mxu0 0.0
    %1438 = vmatprep.subr.mxu0 0.0
    %1439 = vmatpush1.msra.mxu0 0.0
    %1440 = vmatprep.subr.mxu0 0.0
    %1441 = vmatpush1.msra.mxu0 0.0
    %1442 = vmatprep.mubr.f32.mxu0 0.0
    %1443 = vmatmul.mubr.f32.gmra.mrb[0].mxu0 %v1376
    %v1444 = vpop.f32.mrb[0].mxu0
    %v1445 = vadd.f32 0.0, %v1444
    %v1446 = vpop.f32.mrb[0].mxu0
    %1447 = vdwg.mxu0
    %1448 = vrot.lane.b32.xlu0 %v200, 64
    %v1449 = vpop.permute.xlu0 %1448
    %v1452 = vsel %vm203, %v915, 0
    %1454 = vmatprep.subr.mxu0 0.0
    %1455 = vmatpush1.msra.mxu0 %v1449
    %1456 = vmatprep.subr.mxu0 0.0
    %1457 = vmatpush1.msra.mxu0 0.0
    %1458 = vmatprep.subr.mxu0 0.0
    %1459 = vmatpush1.msra.mxu0 0.0
    %1460 = vmatprep.subr.mxu0 0.0
    %1461 = vmatpush1.msra.mxu0 0.0
    %1462 = vmatprep.subr.mxu0 0.0
    %1463 = vmatpush1.msra.mxu0 0.0
    %1464 = vmatprep.subr.mxu0 0.0
    %1465 = vmatpush1.msra.mxu0 0.0
    %1466 = vmatprep.subr.mxu0 0.0
    %1467 = vmatpush1.msra.mxu0 0.0
    %1468 = vmatprep.subr.mxu0 0.0
    %1469 = vmatpush1.msra.mxu0 0.0
    %1470 = vmatprep.subr.mxu0 0.0
    %1471 = vmatpush1.msra.mxu0 0.0
    %1472 = vmatprep.subr.mxu0 0.0
    %1473 = vmatpush1.msra.mxu0 0.0
    %1474 = vmatprep.subr.mxu0 0.0
    %1475 = vmatpush1.msra.mxu0 0.0
    %1476 = vmatprep.subr.mxu0 0.0
    %1477 = vmatpush1.msra.mxu0 0.0
    %1478 = vmatprep.subr.mxu0 0.0
    %1479 = vmatpush1.msra.mxu0 0.0
    %1480 = vmatprep.subr.mxu0 0.0
    %1481 = vmatpush1.msra.mxu0 0.0
    %1482 = vmatprep.subr.mxu0 0.0
    %1483 = vmatpush1.msra.mxu0 0.0
    %1484 = vmatprep.subr.mxu0 0.0
    %1485 = vmatpush1.msra.mxu0 0.0
    %1486 = vmatprep.subr.mxu0 0.0
    %1487 = vmatpush1.msra.mxu0 0.0
    %1488 = vmatprep.subr.mxu0 0.0
    %1489 = vmatpush1.msra.mxu0 0.0
    %1490 = vmatprep.subr.mxu0 0.0
    %1491 = vmatpush1.msra.mxu0 0.0
    %1492 = vmatprep.subr.mxu0 0.0
    %1493 = vmatpush1.msra.mxu0 0.0
    %1494 = vmatprep.subr.mxu0 0.0
    %1495 = vmatpush1.msra.mxu0 0.0
    %1496 = vmatprep.subr.mxu0 0.0
    %1497 = vmatpush1.msra.mxu0 0.0
    %1498 = vmatprep.subr.mxu0 0.0
    %1499 = vmatpush1.msra.mxu0 0.0
    %1500 = vmatprep.subr.mxu0 0.0
    %1501 = vmatpush1.msra.mxu0 0.0
    %1502 = vmatprep.subr.mxu0 0.0
    %1503 = vmatpush1.msra.mxu0 0.0
    %1504 = vmatprep.subr.mxu0 0.0
    %1505 = vmatpush1.msra.mxu0 0.0
    %1506 = vmatprep.subr.mxu0 0.0
    %1507 = vmatpush1.msra.mxu0 0.0
    %1508 = vmatprep.subr.mxu0 0.0
    %1509 = vmatpush1.msra.mxu0 0.0
    %1510 = vmatprep.subr.mxu0 0.0
    %1511 = vmatpush1.msra.mxu0 0.0
    %1512 = vmatprep.subr.mxu0 0.0
    %1513 = vmatpush1.msra.mxu0 0.0
    %1514 = vmatprep.subr.mxu0 0.0
    %1515 = vmatpush1.msra.mxu0 0.0
    %1516 = vmatprep.subr.mxu0 0.0
    %1517 = vmatpush1.msra.mxu0 0.0
    %1518 = vmatprep.mubr.f32.mxu0 0.0
    %1519 = vmatmul.mubr.f32.gmra.mrb[0].mxu0 %v1452
    %v1520 = vpop.f32.mrb[0].mxu0
    %v1521 = vadd.f32 0.0, %v1520
    %v1522 = vpop.f32.mrb[0].mxu0
    %1523 = vdwg.mxu0
    %1526 = vrot.lane.b32.xlu0 %v1141, 8
    %v1527 = vpop.permute.xlu0 %1526
    %1528 = vrot.lane.b32.xlu0 %v1217, 8
    %v1529 = vpop.permute.xlu0 %1528
    %1534 = vrot.lane.b32.xlu0 %v1293, 16
    %v1535 = vpop.permute.xlu0 %1534
    %1536 = vrot.lane.b32.xlu0 %v1369, 16
    %v1537 = vpop.permute.xlu0 %1536
    %1542 = vrot.lane.b32.xlu0 %v1445, 24
    %v1543 = vpop.permute.xlu0 %1542
    %1544 = vrot.lane.b32.xlu0 %v1521, 24
    %v1545 = vpop.permute.xlu0 %1544
    %v1548 = vsel %vm203, %v989, %v1527
    %v1549 = vsel %vm203, %v1065, %v1529
    %vm1550 = vcmask 130048
    %v1551 = vsel %vm1550, %v1548, %v1535
    %v1552 = vsel %vm1550, %v1549, %v1537
    %vm1553 = vcmask 195584
    %v1554 = vsel %vm1553, %v1551, %v1543
    %v1555 = vsel %vm1553, %v1552, %v1545
    %s1556 = scalar_lea.vmem %s3, %s96
    %v1557 = vld [vmem:[%s1556] sm:$0xff]
    %v1558 = vld [vmem:[%s1556 + $0x8] sm:$0xff]
    %v1559 = vld [vmem:[%s1556 + $0x10] sm:$0xff]
    %v1560 = vld [vmem:[%s1556 + $0x18] sm:$0xff]
    %v1562 = vsel %vm56, %v1554, 0
    %v1565 = vsel %vm56, %v1555, 0
    %1567 = vmatprep.subr.mxu0 0.0
    %1568 = vmatpush1.msra.mxu0 %v1557
    %1569 = vmatprep.subr.mxu0 0.0
    %1570 = vmatpush1.msra.mxu0 %v1558
    %1571 = vmatprep.subr.mxu0 0.0
    %1572 = vmatpush1.msra.mxu0 %v1559
    %1573 = vmatprep.subr.mxu0 0.0
    %1574 = vmatpush1.msra.mxu0 %v1560
    %1575 = vmatprep.subr.mxu0 0.0
    %1576 = vmatpush1.msra.mxu0 0.0
    %1577 = vmatprep.subr.mxu0 0.0
    %1578 = vmatpush1.msra.mxu0 0.0
    %1579 = vmatprep.subr.mxu0 0.0
    %1580 = vmatpush1.msra.mxu0 0.0
    %1581 = vmatprep.subr.mxu0 0.0
    %1582 = vmatpush1.msra.mxu0 0.0
    %1583 = vmatprep.subr.mxu0 0.0
    %1584 = vmatpush1.msra.mxu0 0.0
    %1585 = vmatprep.subr.mxu0 0.0
    %1586 = vmatpush1.msra.mxu0 0.0
    %1587 = vmatprep.subr.mxu0 0.0
    %1588 = vmatpush1.msra.mxu0 0.0
    %1589 = vmatprep.subr.mxu0 0.0
    %1590 = vmatpush1.msra.mxu0 0.0
    %1591 = vmatprep.subr.mxu0 0.0
    %1592 = vmatpush1.msra.mxu0 0.0
    %1593 = vmatprep.subr.mxu0 0.0
    %1594 = vmatpush1.msra.mxu0 0.0
    %1595 = vmatprep.subr.mxu0 0.0
    %1596 = vmatpush1.msra.mxu0 0.0
    %1597 = vmatprep.subr.mxu0 0.0
    %1598 = vmatpush1.msra.mxu0 0.0
    %1599 = vmatprep.subr.mxu0 0.0
    %1600 = vmatpush1.msra.mxu0 0.0
    %1601 = vmatprep.subr.mxu0 0.0
    %1602 = vmatpush1.msra.mxu0 0.0
    %1603 = vmatprep.subr.mxu0 0.0
    %1604 = vmatpush1.msra.mxu0 0.0
    %1605 = vmatprep.subr.mxu0 0.0
    %1606 = vmatpush1.msra.mxu0 0.0
    %1607 = vmatprep.subr.mxu0 0.0
    %1608 = vmatpush1.msra.mxu0 0.0
    %1609 = vmatprep.subr.mxu0 0.0
    %1610 = vmatpush1.msra.mxu0 0.0
    %1611 = vmatprep.subr.mxu0 0.0
    %1612 = vmatpush1.msra.mxu0 0.0
    %1613 = vmatprep.subr.mxu0 0.0
    %1614 = vmatpush1.msra.mxu0 0.0
    %1615 = vmatprep.subr.mxu0 0.0
    %1616 = vmatpush1.msra.mxu0 0.0
    %1617 = vmatprep.subr.mxu0 0.0
    %1618 = vmatpush1.msra.mxu0 0.0
    %1619 = vmatprep.subr.mxu0 0.0
    %1620 = vmatpush1.msra.mxu0 0.0
    %1621 = vmatprep.subr.mxu0 0.0
    %1622 = vmatpush1.msra.mxu0 0.0
    %1623 = vmatprep.subr.mxu0 0.0
    %1624 = vmatpush1.msra.mxu0 0.0
    %1625 = vmatprep.subr.mxu0 0.0
    %1626 = vmatpush1.msra.mxu0 0.0
    %1627 = vmatprep.subr.mxu0 0.0
    %1628 = vmatpush1.msra.mxu0 0.0
    %1629 = vmatprep.subr.mxu0 0.0
    %1630 = vmatpush1.msra.mxu0 0.0
    %1631 = vmatprep.mubr.f32.mxu0 0.0
    %1632 = vmatmul.mubr.f32.gmra.mrb[0].mxu0 %v1562
    %v1633 = vpop.f32.mrb[0].mxu0
    %v1634 = vadd.f32 0.0, %v1633
    %v1635 = vpop.f32.mrb[0].mxu0
    %1636 = vmatprep.mubr.f32.mxu0 0.0
    %1637 = vmatmul.mubr.f32.gmra.mrb[0].mxu0 %v1565
    %v1638 = vpop.f32.mrb[0].mxu0
    %v1639 = vadd.f32 0.0, %v1638
    %v1640 = vpop.f32.mrb[0].mxu0
    %1641 = vdwg.mxu0
    %v1642 = vadd.f32 %v51, %v1634
    %v1643 = vadd.f32 %v52, %v1639
    %v1644 = vlaneseq
    %v1645 = vshrl.u32 %v1644, 7
    %v1646 = vsub.s32 3, %v1645
    %v1647 = vrot.slane %v55, %v1646
    %v1648 = vadd.f32 %v1642, %v1647
    %v1649 = vadd.f32 %v1643, %v1647
    %v1650 = vsel %vm56, %v1648, 0.0
    %1651 = vadd.xlane.f32.xlu0 %v1650
    %v1652 = vpop.xlane.xlu0 %1651
    %v1653 = vsel %vm56, %v1649, 0.0
    %1654 = vadd.xlane.f32.xlu0 %v1653
    %v1655 = vpop.xlane.xlu0 %1654
    %v1656 = vmul.f32 %v1652, %v63
    %v1657 = vmul.f32 %v1655, %v63
    %v1658 = vsub.f32 %v1648, %v1656
    %v1659 = vsub.f32 %v1649, %v1657
    %v1660 = vmul.f32 %v1658, %v1658
    %v1661 = vmul.f32 %v1659, %v1659
    %v1662 = vsel %vm56, %v1660, 0.0
    %1663 = vadd.xlane.f32.xlu0 %v1662
    %v1664 = vpop.xlane.xlu0 %1663
    %v1665 = vsel %vm56, %v1661, 0.0
    %1666 = vadd.xlane.f32.xlu0 %v1665
    %v1667 = vpop.xlane.xlu0 %1666
    %v1668 = vmul.f32 %v1664, %v63
    %v1669 = vmul.f32 %v1667, %v63
    %v1670 = vadd.f32 %v1668, 1e-05
    %v1671 = vadd.f32 %v1669, 1e-05
    %v1672 = vrsqrt.pop %v1670
    %v1673 = vrsqrt.pop %v1671
    %v1674 = vmul.f32 %v1658, %v1672
    %v1675 = vmul.f32 %v1659, %v1673
    %v1676 = vlaneseq
    %v1677 = vshrl.u32 %v1676, 7
    %v1678 = vsub.s32 4, %v1677
    %v1679 = vrot.slane %v55, %v1678
    %v1680 = vmul.f32 %v1674, %v1679
    %v1681 = vmul.f32 %v1675, %v1679
    %v1682 = vlaneseq
    %v1683 = vshrl.u32 %v1682, 7
    %v1684 = vsub.s32 5, %v1683
    %v1685 = vrot.slane %v55, %v1684
    %v1686 = vadd.f32 %v1680, %v1685
    %v1687 = vadd.f32 %v1681, %v1685
    %s1688 = scalar_lea.vmem %s4, %s96
    %v1689 = vld [vmem:[%s1688] sm:$0xff]
    %v1690 = vld [vmem:[%s1688 + $0x8] sm:$0xff]
    %v1691 = vld [vmem:[%s1688 + $0x10] sm:$0xff]
    %v1692 = vld [vmem:[%s1688 + $0x18] sm:$0xff]
    %v1693 = vlaneseq
    %v1694 = vshrl.u32 %v1693, 7
    %v1695 = vsub.s32 6, %v1694
    %v1696 = vrot.slane %v55, %v1695
    %v1698 = vsel %vm56, %v1686, 0
    %v1701 = vsel %vm56, %v1687, 0
    %1703 = vmatprep.subr.mxu0 0.0
    %1704 = vmatpush1.msra.mxu0 %v1689
    %1705 = vmatprep.subr.mxu0 0.0
    %1706 = vmatpush1.msra.mxu0 %v1690
    %1707 = vmatprep.subr.mxu0 0.0
    %1708 = vmatpush1.msra.mxu0 %v1691
    %1709 = vmatprep.subr.mxu0 0.0
    %1710 = vmatpush1.msra.mxu0 %v1692
    %1711 = vmatprep.subr.mxu0 0.0
    %1712 = vmatpush1.msra.mxu0 0.0
    %1713 = vmatprep.subr.mxu0 0.0
    %1714 = vmatpush1.msra.mxu0 0.0
    %1715 = vmatprep.subr.mxu0 0.0
    %1716 = vmatpush1.msra.mxu0 0.0
    %1717 = vmatprep.subr.mxu0 0.0
    %1718 = vmatpush1.msra.mxu0 0.0
    %1719 = vmatprep.subr.mxu0 0.0
    %1720 = vmatpush1.msra.mxu0 0.0
    %1721 = vmatprep.subr.mxu0 0.0
    %1722 = vmatpush1.msra.mxu0 0.0
    %1723 = vmatprep.subr.mxu0 0.0
    %1724 = vmatpush1.msra.mxu0 0.0
    %1725 = vmatprep.subr.mxu0 0.0
    %1726 = vmatpush1.msra.mxu0 0.0
    %1727 = vmatprep.subr.mxu0 0.0
    %1728 = vmatpush1.msra.mxu0 0.0
    %1729 = vmatprep.subr.mxu0 0.0
    %1730 = vmatpush1.msra.mxu0 0.0
    %1731 = vmatprep.subr.mxu0 0.0
    %1732 = vmatpush1.msra.mxu0 0.0
    %1733 = vmatprep.subr.mxu0 0.0
    %1734 = vmatpush1.msra.mxu0 0.0
    %1735 = vmatprep.subr.mxu0 0.0
    %1736 = vmatpush1.msra.mxu0 0.0
    %1737 = vmatprep.subr.mxu0 0.0
    %1738 = vmatpush1.msra.mxu0 0.0
    %1739 = vmatprep.subr.mxu0 0.0
    %1740 = vmatpush1.msra.mxu0 0.0
    %1741 = vmatprep.subr.mxu0 0.0
    %1742 = vmatpush1.msra.mxu0 0.0
    %1743 = vmatprep.subr.mxu0 0.0
    %1744 = vmatpush1.msra.mxu0 0.0
    %1745 = vmatprep.subr.mxu0 0.0
    %1746 = vmatpush1.msra.mxu0 0.0
    %1747 = vmatprep.subr.mxu0 0.0
    %1748 = vmatpush1.msra.mxu0 0.0
    %1749 = vmatprep.subr.mxu0 0.0
    %1750 = vmatpush1.msra.mxu0 0.0
    %1751 = vmatprep.subr.mxu0 0.0
    %1752 = vmatpush1.msra.mxu0 0.0
    %1753 = vmatprep.subr.mxu0 0.0
    %1754 = vmatpush1.msra.mxu0 0.0
    %1755 = vmatprep.subr.mxu0 0.0
    %1756 = vmatpush1.msra.mxu0 0.0
    %1757 = vmatprep.subr.mxu0 0.0
    %1758 = vmatpush1.msra.mxu0 0.0
    %1759 = vmatprep.subr.mxu0 0.0
    %1760 = vmatpush1.msra.mxu0 0.0
    %1761 = vmatprep.subr.mxu0 0.0
    %1762 = vmatpush1.msra.mxu0 0.0
    %1763 = vmatprep.subr.mxu0 0.0
    %1764 = vmatpush1.msra.mxu0 0.0
    %1765 = vmatprep.subr.mxu0 0.0
    %1766 = vmatpush1.msra.mxu0 0.0
    %1767 = vmatprep.mubr.f32.mxu0 0.0
    %1768 = vmatmul.mubr.f32.gmra.mrb[0].mxu0 %v1698
    %v1769 = vpop.f32.mrb[0].mxu0
    %v1770 = vadd.f32 %v1696, %v1769
    %v1771 = vpop.f32.mrb[0].mxu0
    %1772 = vmatprep.mubr.f32.mxu0 0.0
    %1773 = vmatmul.mubr.f32.gmra.mrb[0].mxu0 %v1701
    %v1774 = vpop.f32.mrb[0].mxu0
    %v1775 = vadd.f32 %v1696, %v1774
    %v1776 = vpop.f32.mrb[0].mxu0
    %1777 = vdwg.mxu0
    %v1778 = vmul.f32 %v1770, 1.702
    %v1779 = vmul.f32 %v1775, 1.702
    %v1780 = vxor.u32 %v1778, 2147483648
    %v1781 = vxor.u32 %v1779, 2147483648
    %v1782 = vmul.f32 %v1780, 1.442695
    %v1783 = vpow.pop %v1782
    %v1784 = vmul.f32 %v1781, 1.442695
    %v1785 = vpow.pop %v1784
    %v1786 = vadd.f32 %v1783, 1.0
    %v1787 = vadd.f32 %v1785, 1.0
    %v1788 = vrcp.pop %v1786
    %v1789 = vmul.f32 1.0, %v1788
    %v1790 = vrcp.pop %v1787
    %v1791 = vmul.f32 1.0, %v1790
    %v1792 = vmul.f32 %v1770, %v1789
    %v1793 = vmul.f32 %v1775, %v1791
    %s1794 = smul.u32 %s46, 128
    %s1795 = scalar_lea.vmem %s5, %s1794
    %v1796 = vld [vmem:[%s1795] sm:$0xff]
    %v1797 = vld [vmem:[%s1795 + $0x8] sm:$0xff]
    %v1798 = vld [vmem:[%s1795 + $0x10] sm:$0xff]
    %v1799 = vld [vmem:[%s1795 + $0x18] sm:$0xff]
    %v1800 = vld [vmem:[%s1795 + $0x20] sm:$0xff]
    %v1801 = vld [vmem:[%s1795 + $0x28] sm:$0xff]
    %v1802 = vld [vmem:[%s1795 + $0x30] sm:$0xff]
    %v1803 = vld [vmem:[%s1795 + $0x38] sm:$0xff]
    %v1804 = vld [vmem:[%s1795 + $0x40] sm:$0xff]
    %v1805 = vld [vmem:[%s1795 + $0x48] sm:$0xff]
    %v1806 = vld [vmem:[%s1795 + $0x50] sm:$0xff]
    %v1807 = vld [vmem:[%s1795 + $0x58] sm:$0xff]
    %v1808 = vld [vmem:[%s1795 + $0x60] sm:$0xff]
    %v1809 = vld [vmem:[%s1795 + $0x68] sm:$0xff]
    %v1810 = vld [vmem:[%s1795 + $0x70] sm:$0xff]
    %v1811 = vld [vmem:[%s1795 + $0x78] sm:$0xff]
    %1812 = vmatprep.subr.mxu0 0.0
    %1813 = vmatpush1.msra.mxu0 %v1796
    %1814 = vmatprep.subr.mxu0 0.0
    %1815 = vmatpush1.msra.mxu0 %v1797
    %1816 = vmatprep.subr.mxu0 0.0
    %1817 = vmatpush1.msra.mxu0 %v1798
    %1818 = vmatprep.subr.mxu0 0.0
    %1819 = vmatpush1.msra.mxu0 %v1799
    %1820 = vmatprep.subr.mxu0 0.0
    %1821 = vmatpush1.msra.mxu0 %v1800
    %1822 = vmatprep.subr.mxu0 0.0
    %1823 = vmatpush1.msra.mxu0 %v1801
    %1824 = vmatprep.subr.mxu0 0.0
    %1825 = vmatpush1.msra.mxu0 %v1802
    %1826 = vmatprep.subr.mxu0 0.0
    %1827 = vmatpush1.msra.mxu0 %v1803
    %1828 = vmatprep.subr.mxu0 0.0
    %1829 = vmatpush1.msra.mxu0 %v1804
    %1830 = vmatprep.subr.mxu0 0.0
    %1831 = vmatpush1.msra.mxu0 %v1805
    %1832 = vmatprep.subr.mxu0 0.0
    %1833 = vmatpush1.msra.mxu0 %v1806
    %1834 = vmatprep.subr.mxu0 0.0
    %1835 = vmatpush1.msra.mxu0 %v1807
    %1836 = vmatprep.subr.mxu0 0.0
    %1837 = vmatpush1.msra.mxu0 %v1808
    %1838 = vmatprep.subr.mxu0 0.0
    %1839 = vmatpush1.msra.mxu0 %v1809
    %1840 = vmatprep.subr.mxu0 0.0
    %1841 = vmatpush1.msra.mxu0 %v1810
    %1842 = vmatprep.subr.mxu0 0.0
    %1843 = vmatpush1.msra.mxu0 %v1811
    %1844 = vmatprep.subr.mxu0 0.0
    %1845 = vmatpush1.msra.mxu0 0.0
    %1846 = vmatprep.subr.mxu0 0.0
    %1847 = vmatpush1.msra.mxu0 0.0
    %1848 = vmatprep.subr.mxu0 0.0
    %1849 = vmatpush1.msra.mxu0 0.0
    %1850 = vmatprep.subr.mxu0 0.0
    %1851 = vmatpush1.msra.mxu0 0.0
    %1852 = vmatprep.subr.mxu0 0.0
    %1853 = vmatpush1.msra.mxu0 0.0
    %1854 = vmatprep.subr.mxu0 0.0
    %1855 = vmatpush1.msra.mxu0 0.0
    %1856 = vmatprep.subr.mxu0 0.0
    %1857 = vmatpush1.msra.mxu0 0.0
    %1858 = vmatprep.subr.mxu0 0.0
    %1859 = vmatpush1.msra.mxu0 0.0
    %1860 = vmatprep.subr.mxu0 0.0
    %1861 = vmatpush1.msra.mxu0 0.0
    %1862 = vmatprep.subr.mxu0 0.0
    %1863 = vmatpush1.msra.mxu0 0.0
    %1864 = vmatprep.subr.mxu0 0.0
    %1865 = vmatpush1.msra.mxu0 0.0
    %1866 = vmatprep.subr.mxu0 0.0
    %1867 = vmatpush1.msra.mxu0 0.0
    %1868 = vmatprep.subr.mxu0 0.0
    %1869 = vmatpush1.msra.mxu0 0.0
    %1870 = vmatprep.subr.mxu0 0.0
    %1871 = vmatpush1.msra.mxu0 0.0
    %1872 = vmatprep.subr.mxu0 0.0
    %1873 = vmatpush1.msra.mxu0 0.0
    %1874 = vmatprep.subr.mxu0 0.0
    %1875 = vmatpush1.msra.mxu0 0.0
    %1876 = vmatprep.mubr.f32.mxu0 0.0
    %1877 = vmatmul.mubr.f32.gmra.mrb[0].mxu0 %v1792
    %v1878 = vpop.f32.mrb[0].mxu0
    %v1879 = vadd.f32 0.0, %v1878
    %v1880 = vpop.f32.mrb[0].mxu0
    %1881 = vmatprep.mubr.f32.mxu0 0.0
    %1882 = vmatmul.mubr.f32.gmra.mrb[0].mxu0 %v1793
    %v1883 = vpop.f32.mrb[0].mxu0
    %v1884 = vadd.f32 0.0, %v1883
    %v1885 = vpop.f32.mrb[0].mxu0
    %1886 = vdwg.mxu0
    %v1887 = vadd.f32 %v1648, %v1879
    %v1888 = vadd.f32 %v1649, %v1884
    %v1889 = vlaneseq
    %v1890 = vshrl.u32 %v1889, 7
    %v1891 = vsub.s32 7, %v1890
    %v1892 = vrot.slane %v55, %v1891
    %v1893 = vadd.f32 %v1887, %v1892
    %v1894 = vadd.f32 %v1888, %v1892
  $region38: #{clip_text_forward.1} parent=0 // loop_footer
    %s50 = sadd.s32 1, %s46
  $region39: #{clip_text_forward.1} parent=0 // loop_footer_branch
    %45 = sbr.rel target = $region35
  $region40: #{clip_text_forward.1} parent=0 // loop_exit
    _
  %v1895 = vld [vmem:[%s7] sm:$0x1]
  %v1896 = vld [vmem:[%s7 + $0x1] sm:$0x1]
  %vm1897 = vcmask 261120
  %v1898 = vsel %vm1897, %v51, 0.0
  %1899 = vadd.xlane.f32.xlu0 %v1898
  %v1900 = vpop.xlane.xlu0 %1899
  %v1901 = vsel %vm1897, %v52, 0.0
  %1902 = vadd.xlane.f32.xlu0 %v1901
  %v1903 = vpop.xlane.xlu0 %1902
  %v1904 = vrcp.pop 32.0
  %v1905 = vmul.f32 %v1900, %v1904
  %v1906 = vmul.f32 %v1903, %v1904
  %v1907 = vsub.f32 %v51, %v1905
  %v1908 = vsub.f32 %v52, %v1906
  %v1909 = vmul.f32 %v1907, %v1907
  %v1910 = vmul.f32 %v1908, %v1908
  %v1911 = vsel %vm1897, %v1909, 0.0
  %1912 = vadd.xlane.f32.xlu0 %v1911
  %v1913 = vpop.xlane.xlu0 %1912
  %v1914 = vsel %vm1897, %v1910, 0.0
  %1915 = vadd.xlane.f32.xlu0 %v1914
  %v1916 = vpop.xlane.xlu0 %1915
  %v1917 = vmul.f32 %v1913, %v1904
  %v1918 = vmul.f32 %v1916, %v1904
  %v1919 = vadd.f32 %v1917, 1e-05
  %v1920 = vadd.f32 %v1918, 1e-05
  %v1921 = vrsqrt.pop %v1919
  %v1922 = vrsqrt.pop %v1920
  %v1923 = vmul.f32 %v1907, %v1921
  %v1924 = vmul.f32 %v1908, %v1922
  %v1925 = vlaneseq
  %v1926 = vshrl.u32 %v1925, 7
  %v1927 = vsub.s32 0, %v1926
  %v1928 = vrot.slane %v1895, %v1927
  %v1929 = vmul.f32 %v1923, %v1928
  %v1930 = vmul.f32 %v1924, %v1928
  %v1931 = vlaneseq
  %v1932 = vshrl.u32 %v1931, 7
  %v1933 = vsub.s32 0, %v1932
  %v1934 = vrot.slane %v1896, %v1933
  %v1935 = vadd.f32 %v1929, %v1934
  %v1936 = vadd.f32 %v1930, %v1934
  %1937 = vst.msk [vmem:[%s9] sm:$0xff] %vm1897, %v1935
  %1938 = vst.msk [vmem:[%s9 + $0x8] sm:$0xff] %vm1897, %v1936
  %s1939 = sld [smem:[#allocation3]]
  %s1940 = scalar_lea.vmem %s9, %s1939
  %v1941 = vld [vmem:[%s1940] sm:$0x1]
  %s1942 = sld [smem:[#allocation3 + $0x1]]
  %s1943 = scalar_lea.vmem %s9, %s1942
  %v1944 = vld [vmem:[%s1943] sm:$0x1]
  %v1946 = vrot.slane %v1944, 7
  %vm1948 = vcmask 1040384
  %v1949 = vsel %vm1948, %v1941, %v1946
  %v1950 = vld [vmem:[%s8] sm:$0xff]
  %v1951 = vld [vmem:[%s8 + $0x8] sm:$0xff]
  %v1952 = vld [vmem:[%s8 + $0x10] sm:$0xff]
  %v1953 = vld [vmem:[%s8 + $0x18] sm:$0xff]
  %v1955 = vsel %vm1897, %v1949, 0
  %1957 = vmatprep.subr.mxu0 0.0
  %1958 = vmatpush1.msra.mxu0 %v1950
  %1959 = vmatprep.subr.mxu0 0.0
  %1960 = vmatpush1.msra.mxu0 %v1951
  %1961 = vmatprep.subr.mxu0 0.0
  %1962 = vmatpush1.msra.mxu0 %v1952
  %1963 = vmatprep.subr.mxu0 0.0
  %1964 = vmatpush1.msra.mxu0 %v1953
  %1965 = vmatprep.subr.mxu0 0.0
  %1966 = vmatpush1.msra.mxu0 0.0
  %1967 = vmatprep.subr.mxu0 0.0
  %1968 = vmatpush1.msra.mxu0 0.0
  %1969 = vmatprep.subr.mxu0 0.0
  %1970 = vmatpush1.msra.mxu0 0.0
  %1971 = vmatprep.subr.mxu0 0.0
  %1972 = vmatpush1.msra.mxu0 0.0
  %1973 = vmatprep.subr.mxu0 0.0
  %1974 = vmatpush1.msra.mxu0 0.0
  %1975 = vmatprep.subr.mxu0 0.0
  %1976 = vmatpush1.msra.mxu0 0.0
  %1977 = vmatprep.subr.mxu0 0.0
  %1978 = vmatpush1.msra.mxu0 0.0
  %1979 = vmatprep.subr.mxu0 0.0
  %1980 = vmatpush1.msra.mxu0 0.0
  %1981 = vmatprep.subr.mxu0 0.0
  %1982 = vmatpush1.msra.mxu0 0.0
  %1983 = vmatprep.subr.mxu0 0.0
  %1984 = vmatpush1.msra.mxu0 0.0
  %1985 = vmatprep.subr.mxu0 0.0
  %1986 = vmatpush1.msra.mxu0 0.0
  %1987 = vmatprep.subr.mxu0 0.0
  %1988 = vmatpush1.msra.mxu0 0.0
  %1989 = vmatprep.subr.mxu0 0.0
  %1990 = vmatpush1.msra.mxu0 0.0
  %1991 = vmatprep.subr.mxu0 0.0
  %1992 = vmatpush1.msra.mxu0 0.0
  %1993 = vmatprep.subr.mxu0 0.0
  %1994 = vmatpush1.msra.mxu0 0.0
  %1995 = vmatprep.subr.mxu0 0.0
  %1996 = vmatpush1.msra.mxu0 0.0
  %1997 = vmatprep.subr.mxu0 0.0
  %1998 = vmatpush1.msra.mxu0 0.0
  %1999 = vmatprep.subr.mxu0 0.0
  %2000 = vmatpush1.msra.mxu0 0.0
  %2001 = vmatprep.subr.mxu0 0.0
  %2002 = vmatpush1.msra.mxu0 0.0
  %2003 = vmatprep.subr.mxu0 0.0
  %2004 = vmatpush1.msra.mxu0 0.0
  %2005 = vmatprep.subr.mxu0 0.0
  %2006 = vmatpush1.msra.mxu0 0.0
  %2007 = vmatprep.subr.mxu0 0.0
  %2008 = vmatpush1.msra.mxu0 0.0
  %2009 = vmatprep.subr.mxu0 0.0
  %2010 = vmatpush1.msra.mxu0 0.0
  %2011 = vmatprep.subr.mxu0 0.0
  %2012 = vmatpush1.msra.mxu0 0.0
  %2013 = vmatprep.subr.mxu0 0.0
  %2014 = vmatpush1.msra.mxu0 0.0
  %2015 = vmatprep.subr.mxu0 0.0
  %2016 = vmatpush1.msra.mxu0 0.0
  %2017 = vmatprep.subr.mxu0 0.0
  %2018 = vmatpush1.msra.mxu0 0.0
  %2019 = vmatprep.subr.mxu0 0.0
  %2020 = vmatpush1.msra.mxu0 0.0
  %2021 = vmatprep.mubr.f32.mxu0 0.0
  %2022 = vmatmul.mubr.f32.gmra.mrb[0].mxu0 %v1955
  %v2023 = vpop.f32.mrb[0].mxu0
  %v2024 = vadd.f32 0.0, %v2023
  %v2025 = vpop.f32.mrb[0].mxu0
  %2026 = vdwg.mxu0
  %vm2027 = vcmask 254976
  %2028 = vst.msk [vmem:[%s10] sm:$0x3] %vm2027, %v2024
  // Predicated region
  $region41: #{clip_text_forward.1} parent=0 // pred_check
    _
  $region42: #{clip_text_forward.1} parent=0 // pred_check_branch
    %2030 = sbr.rel (0) target = $region44
  $region43: #{clip_text_forward.1} parent=0 // pred_region
    _
  $region44: #{clip_text_forward.1} parent=0 // pred_fallthru
    _
  // Predicated region
  $region45: #{clip_text_forward.1} parent=0 // pred_check
    _
  $region46: #{clip_text_forward.1} parent=0 // pred_check_branch
    %2032 = sbr.rel (0) target = $region48
  $region47: #{clip_text_forward.1} parent=0 // pred_region
    _
  $region48: #{clip_text_forward.1} parent=0 // pred_fallthru
    _
  // Predicated region
  $region49: #{clip_text_forward.1} parent=0 // pred_check
    _
  $region50: #{clip_text_forward.1} parent=0 // pred_check_branch
    %2034 = sbr.rel (0) target = $region52
  $region51: #{clip_text_forward.1} parent=0 // pred_region
    _
  $region52: #{clip_text_forward.1} parent=0 // pred_fallthru
    _
  // Predicated region
  $region53: #{clip_text_forward.1} parent=0 // pred_check
    _
  $region54: #{clip_text_forward.1} parent=0 // pred_check_branch
    %2036 = sbr.rel (0) target = $region56
  $region55: #{clip_text_forward.1} parent=0 // pred_region
    _
  $region56: #{clip_text_forward.1} parent=0 // pred_fallthru
    _

</llo_original>
